<compile_context>
chip_gen: v7x
topology: tpu7x:2x2x1
jax: 0.10.0
libtpu: 0.0.40
codegen_flags: <defaults>
</compile_context>

<pallas_src>
import jax
import jax.numpy as jnp
from jax.experimental import pallas as pl
from jax.experimental.pallas import tpu as pltpu

INPUT_DIM = 2
TIME_DIM = 1
HIDDEN_DIM = 128
TILE_N_MAX = 2048      # max rows per grid step (VMEM use per step ~ a few MiB)


def _round_up(a, b):
    return ((a + b - 1) // b) * b


def _cdiv(a, b):
    return (a + b - 1) // b


def _bf16_activation_ok():
    """bf16 VPU/EUP exists on v6e / v7x; not on v2-v5 generations."""
    try:
        kind = jax.devices()[0].device_kind.lower()
    except Exception:
        return True
    for tag in ("v2", "v3", "v4", "v5"):
        if tag in kind:
            return False
    return True


USE_BF16_ACT = _bf16_activation_ok()


def _swish(z):
    # sigmoid(z) * z == z * 0.5 * (tanh(z/2) + 1): a single EUP transcendental
    # instead of exp + reciprocal.  Works in bf16 or f32 (weak literals do not
    # promote the dtype).
    return z * (0.5 * (jnp.tanh(z * 0.5) + 1.0))


def make_mlp_kernel(use_bf16_act):
    act_dtype = jnp.bfloat16 if use_bf16_act else jnp.float32

    def mlp_kernel(x_ref, t_ref,
                   w1_ref, b1_ref,
                   w2_ref, b2_ref,
                   w3_ref, b3_ref,
                   w4_ref, b4_ref,
                   w5_ref, b5_ref,
                   out_ref):
        # ---- Layer 1: K=3 contraction as VPU broadcast-FMAs (no MXU) ----
        x = x_ref[...]                               # (T, 2)  f32
        t = t_ref[...]                               # (T, 1)  f32
        pre = (x[:, 0:1] * w1_ref[0:1, :]
               + x[:, 1:2] * w1_ref[1:2, :]
               + t * w1_ref[2:3, :]
               + b1_ref[...])                        # (T, 128) f32
        h = _swish(pre.astype(act_dtype)).astype(jnp.bfloat16)

        # ---- Layers 2-4: bf16 MXU matmul, f32 acc, Swish in act_dtype ----
        for w_ref, b_ref in ((w2_ref, b2_ref), (w3_ref, b3_ref), (w4_ref, b4_ref)):
            acc = jnp.dot(h, w_ref[...], preferred_element_type=jnp.float32)
            z = acc.astype(act_dtype) + b_ref[...]
            h = _swish(z).astype(jnp.bfloat16)

        # ---- Layer 5: bf16 MXU matmul to the 2 real output columns ----
        y = jnp.dot(h, w5_ref[...], preferred_element_type=jnp.float32)
        out_ref[...] = y + b5_ref[...]               # (T, 2) f32 store

    return mlp_kernel


def init_params(key):
    """Params matching nn.Linear default init (uniform +-1/sqrt(fan_in)).

    Weights stored as (in, out) so the kernel computes h @ W + b,
    which equals PyTorch's h @ W_pt.T + b.
    """
    dims = [INPUT_DIM + TIME_DIM, HIDDEN_DIM, HIDDEN_DIM, HIDDEN_DIM,
            HIDDEN_DIM, INPUT_DIM]
    params = []
    for i in range(5):
        fan_in, fan_out = dims[i], dims[i + 1]
        key, kw, kb = jax.random.split(key, 3)
        bound = 1.0 / jnp.sqrt(fan_in)
        w = jax.random.uniform(kw, (fan_in, fan_out), jnp.float32, -bound, bound)
        b = jax.random.uniform(kb, (1, fan_out), jnp.float32, -bound, bound)
        params.append((w, b))
    return params


@jax.jit
def mlp_forward(x, t, params):
    """x: any shape reshapable to (-1, INPUT_DIM); t: scalar or per-sample."""
    sz = x.shape
    xf = x.reshape(-1, INPUT_DIM).astype(jnp.float32)
    n = xf.shape[0]
    tf = jnp.broadcast_to(t.reshape(-1, 1).astype(jnp.float32), (n, TIME_DIM))

    # Tile selection: >= 2 grid steps whenever n >= 16 (keeps both v7x TCs
    # busy via the "parallel" batch axis), capped at TILE_N_MAX for large N.
    if n < 16:
        tile = max(8, _round_up(n, 8))
    else:
        tile = min(TILE_N_MAX, _round_up(_cdiv(n, 2), 8))
    n_pad = _round_up(n, tile)
    grid = (n_pad // tile,)

    if n_pad != n:
        xf = jnp.pad(xf, ((0, n_pad - n), (0, 0)))
        tf = jnp.pad(tf, ((0, n_pad - n), (0, 0)))

    (w1, b1), (w2, b2), (w3, b3), (w4, b4), (w5, b5) = params

    # Hidden + output weights in bf16 for the MXU (accumulation stays f32).
    w2b = w2.astype(jnp.bfloat16)
    w3b = w3.astype(jnp.bfloat16)
    w4b = w4.astype(jnp.bfloat16)
    w5b = w5.astype(jnp.bfloat16)
    bias_dtype = jnp.bfloat16 if USE_BF16_ACT else jnp.float32
    b2c = b2.astype(bias_dtype)
    b3c = b3.astype(bias_dtype)
    b4c = b4.astype(bias_dtype)

    def resident(shape):
        # Constant block index -> fetched once, stays resident in VMEM.
        # TODO(synk): could add pipeline_mode=pl.Buffered(1) to drop the
        # unused second buffer; skipped to keep compilation maximally robust.
        return pl.BlockSpec(shape, lambda i: (0, 0))

    in_specs = [
        pl.BlockSpec((tile, INPUT_DIM), lambda i: (i, 0)),   # x tile
        pl.BlockSpec((tile, TIME_DIM), lambda i: (i, 0)),    # t tile
        resident(w1.shape), resident(b1.shape),
        resident(w2b.shape), resident(b2c.shape),
        resident(w3b.shape), resident(b3c.shape),
        resident(w4b.shape), resident(b4c.shape),
        resident(w5b.shape), resident(b5.shape),
    ]

    out = pl.pallas_call(
        make_mlp_kernel(USE_BF16_ACT),
        out_shape=jax.ShapeDtypeStruct((n_pad, INPUT_DIM), jnp.float32),
        grid_spec=pltpu.PrefetchScalarGridSpec(
            num_scalar_prefetch=0,
            grid=grid,
            in_specs=in_specs,
            out_specs=pl.BlockSpec((tile, INPUT_DIM), lambda i: (i, 0)),
        ),
        compiler_params=pltpu.CompilerParams(
            dimension_semantics=("parallel",)),
    )(xf, tf, w1, b1, w2b, b2c, w3b, b3c, w4b, b4c, w5b, b5)

    return out[:n, :].reshape(sz)


def mlp_reference_f32(x, t, params):
    """Pure f32 reference matching the PyTorch module exactly."""
    sz = x.shape
    xf = x.reshape(-1, INPUT_DIM).astype(jnp.float32)
    n = xf.shape[0]
    tf = jnp.broadcast_to(t.reshape(-1, 1).astype(jnp.float32), (n, 1))
    h = jnp.concatenate([xf, tf], axis=1)
    for idx, (w, b) in enumerate(params):
        h = h @ w + b
        if idx < 4:
            h = jax.nn.sigmoid(h) * h
    return h.reshape(sz)


def mlp_reference_mixed(x, t, params):
    """Reference mirroring the kernel's dtype/formula flow."""
    act_dtype = jnp.bfloat16 if USE_BF16_ACT else jnp.float32
    sz = x.shape
    xf = x.reshape(-1, INPUT_DIM).astype(jnp.float32)
    n = xf.shape[0]
    tf = jnp.broadcast_to(t.reshape(-1, 1).astype(jnp.float32), (n, 1))
    (w1, b1), (w2, b2), (w3, b3), (w4, b4), (w5, b5) = params
    pre = xf[:, 0:1] * w1[0:1, :] + xf[:, 1:2] * w1[1:2, :] + tf * w1[2:3, :] + b1
    h = _swish(pre.astype(act_dtype)).astype(jnp.bfloat16)
    for (w, b) in ((w2, b2), (w3, b3), (w4, b4)):
        acc = jnp.dot(h, w.astype(jnp.bfloat16), preferred_element_type=jnp.float32)
        z = acc.astype(act_dtype) + b.astype(act_dtype)
        h = _swish(z).astype(jnp.bfloat16)
    y = jnp.dot(h, w5.astype(jnp.bfloat16), preferred_element_type=jnp.float32) + b5
    return y.reshape(sz)


if __name__ == "__main__":
    key = jax.random.PRNGKey(0)
    kp, kx, kt = jax.random.split(key, 3)

    params = init_params(kp)

    N = 256  # number of 2-D points
    x = jax.random.normal(kx, (N, INPUT_DIM), jnp.float32)
    t = jax.random.uniform(kt, (N,), jnp.float32)

    out = mlp_forward(x, t, params)
    out = jax.block_until_ready(out)

    assert out.shape == x.shape

    # Kernel-implementation check against a same-precision reference.
    ref_mixed = mlp_reference_mixed(x, t, params)
    assert jnp.allclose(out, ref_mixed, atol=2e-2, rtol=2e-2), \
        "mismatch vs. mixed-precision reference"

    # Semantics check against the pure-f32 PyTorch-equivalent reference
    # (looser tolerance for bf16 matmul/activation drift).
    ref_f32 = mlp_reference_f32(x, t, params)
    assert jnp.allclose(out, ref_f32, atol=3e-2, rtol=3e-2), \
        "mismatch vs. f32 reference"

    print("KERNEL_OK")
</pallas_src>

<mosaic_0001>
module attributes {stable_mosaic.version = 11 : i64} {
  func.func @mlp_kernel(%arg0: i32, %arg1: memref<128x2xf32, #tpu.memory_space<vmem>>, %arg2: memref<128x1xf32, #tpu.memory_space<vmem>>, %arg3: memref<3x128xf32, #tpu.memory_space<vmem>>, %arg4: memref<1x128xf32, #tpu.memory_space<vmem>>, %arg5: memref<128x128xbf16, #tpu.memory_space<vmem>>, %arg6: memref<1x128xbf16, #tpu.memory_space<vmem>>, %arg7: memref<128x128xbf16, #tpu.memory_space<vmem>>, %arg8: memref<1x128xbf16, #tpu.memory_space<vmem>>, %arg9: memref<128x128xbf16, #tpu.memory_space<vmem>>, %arg10: memref<1x128xbf16, #tpu.memory_space<vmem>>, %arg11: memref<128x2xbf16, #tpu.memory_space<vmem>>, %arg12: memref<1x2xf32, #tpu.memory_space<vmem>>, %arg13: memref<128x2xf32, #tpu.memory_space<vmem>>) attributes {dimension_semantics = [#tpu.dimension_semantics<parallel>], iteration_bounds = array<i64: 2>, scalar_prefetch = 0 : i64, scratch_operands = 0 : i64, tpu.core_type = #tpu.core_type<tc>, window_params = [{transform_indices = @transform_0, window_bounds = array<i64: 128, 2>}, {transform_indices = @transform_1, window_bounds = array<i64: 128, 1>}, {pipeline_mode = #tpu.pipeline_mode<synchronous>, transform_indices = @transform_2, window_bounds = array<i64: 3, 128>}, {pipeline_mode = #tpu.pipeline_mode<synchronous>, transform_indices = @transform_3, window_bounds = array<i64: 1, 128>}, {pipeline_mode = #tpu.pipeline_mode<synchronous>, transform_indices = @transform_4, window_bounds = array<i64: 128, 128>}, {pipeline_mode = #tpu.pipeline_mode<synchronous>, transform_indices = @transform_5, window_bounds = array<i64: 1, 128>}, {pipeline_mode = #tpu.pipeline_mode<synchronous>, transform_indices = @transform_6, window_bounds = array<i64: 128, 128>}, {pipeline_mode = #tpu.pipeline_mode<synchronous>, transform_indices = @transform_7, window_bounds = array<i64: 1, 128>}, {pipeline_mode = #tpu.pipeline_mode<synchronous>, transform_indices = @transform_8, window_bounds = array<i64: 128, 128>}, {pipeline_mode = #tpu.pipeline_mode<synchronous>, transform_indices = @transform_9, window_bounds = array<i64: 1, 128>}, {pipeline_mode = #tpu.pipeline_mode<synchronous>, transform_indices = @transform_10, window_bounds = array<i64: 128, 2>}, {pipeline_mode = #tpu.pipeline_mode<synchronous>, transform_indices = @transform_11, window_bounds = array<i64: 1, 2>}, {transform_indices = @transform_12, window_bounds = array<i64: 128, 2>}]} {
    %c0 = arith.constant 0 : index
    %c0_0 = arith.constant 0 : index
    %0 = vector.load %arg1[%c0, %c0_0] : memref<128x2xf32, #tpu.memory_space<vmem>>, vector<128x2xf32>
    %c0_1 = arith.constant 0 : index
    %c0_2 = arith.constant 0 : index
    %1 = vector.load %arg2[%c0_1, %c0_2] : memref<128x1xf32, #tpu.memory_space<vmem>>, vector<128x1xf32>
    %2 = vector.extract_strided_slice %0 {offsets = [0, 0], sizes = [128, 1], strides = [1, 1]} : vector<128x2xf32> to vector<128x1xf32>
    %c0_3 = arith.constant 0 : index
    %c0_4 = arith.constant 0 : index
    %3 = vector.load %arg3[%c0_3, %c0_4] : memref<3x128xf32, #tpu.memory_space<vmem>>, vector<1x128xf32>
    %4 = vector.broadcast %2 : vector<128x1xf32> to vector<128x128xf32>
    %5 = vector.broadcast %3 : vector<1x128xf32> to vector<128x128xf32>
    %6 = arith.mulf %4, %5 : vector<128x128xf32>
    %7 = vector.extract_strided_slice %0 {offsets = [0, 1], sizes = [128, 1], strides = [1, 1]} : vector<128x2xf32> to vector<128x1xf32>
    %c1 = arith.constant 1 : index
    %c0_5 = arith.constant 0 : index
    %8 = vector.load %arg3[%c1, %c0_5] : memref<3x128xf32, #tpu.memory_space<vmem>>, vector<1x128xf32>
    %9 = vector.broadcast %7 : vector<128x1xf32> to vector<128x128xf32>
    %10 = vector.broadcast %8 : vector<1x128xf32> to vector<128x128xf32>
    %11 = arith.mulf %9, %10 : vector<128x128xf32>
    %12 = arith.addf %6, %11 : vector<128x128xf32>
    %c2 = arith.constant 2 : index
    %c0_6 = arith.constant 0 : index
    %13 = vector.load %arg3[%c2, %c0_6] : memref<3x128xf32, #tpu.memory_space<vmem>>, vector<1x128xf32>
    %14 = vector.broadcast %1 : vector<128x1xf32> to vector<128x128xf32>
    %15 = vector.broadcast %13 : vector<1x128xf32> to vector<128x128xf32>
    %16 = arith.mulf %14, %15 : vector<128x128xf32>
    %17 = arith.addf %12, %16 : vector<128x128xf32>
    %c0_7 = arith.constant 0 : index
    %c0_8 = arith.constant 0 : index
    %18 = vector.load %arg4[%c0_7, %c0_8] : memref<1x128xf32, #tpu.memory_space<vmem>>, vector<1x128xf32>
    %19 = vector.broadcast %18 : vector<1x128xf32> to vector<128x128xf32>
    %20 = arith.addf %17, %19 : vector<128x128xf32>
    %21 = arith.truncf %20 : vector<128x128xf32> to vector<128x128xbf16>
    %cst = arith.constant 5.000000e-01 : bf16
    %22 = vector.broadcast %cst : bf16 to vector<128x128xbf16>
    %23 = arith.mulf %21, %22 : vector<128x128xbf16>
    %24 = math.tanh %23 : vector<128x128xbf16>
    %cst_9 = arith.constant 1.000000e+00 : bf16
    %25 = vector.broadcast %cst_9 : bf16 to vector<128x128xbf16>
    %26 = arith.addf %24, %25 : vector<128x128xbf16>
    %cst_10 = arith.constant 5.000000e-01 : bf16
    %27 = vector.broadcast %cst_10 : bf16 to vector<128x128xbf16>
    %28 = arith.mulf %27, %26 : vector<128x128xbf16>
    %29 = arith.mulf %21, %28 : vector<128x128xbf16>
    %c0_11 = arith.constant 0 : index
    %c0_12 = arith.constant 0 : index
    %30 = vector.load %arg5[%c0_11, %c0_12] : memref<128x128xbf16, #tpu.memory_space<vmem>>, vector<128x128xbf16>
    %cst_13 = arith.constant dense<0.000000e+00> : vector<128x128xf32>
    %31 = tpu.matmul %29, %30, %cst_13 {dimension_numbers = #tpu.dot_dimension_numbers<[1], [0], [0], [1], [0, 0, 1, 1], [], []>} : vector<128x128xbf16>, vector<128x128xbf16>, vector<128x128xf32> -> vector<128x128xf32>
    %32 = arith.truncf %31 : vector<128x128xf32> to vector<128x128xbf16>
    %c0_14 = arith.constant 0 : index
    %c0_15 = arith.constant 0 : index
    %33 = vector.load %arg6[%c0_14, %c0_15] : memref<1x128xbf16, #tpu.memory_space<vmem>>, vector<1x128xbf16>
    %34 = vector.broadcast %33 : vector<1x128xbf16> to vector<128x128xbf16>
    %35 = arith.addf %32, %34 : vector<128x128xbf16>
    %cst_16 = arith.constant 5.000000e-01 : bf16
    %36 = vector.broadcast %cst_16 : bf16 to vector<128x128xbf16>
    %37 = arith.mulf %35, %36 : vector<128x128xbf16>
    %38 = math.tanh %37 : vector<128x128xbf16>
    %cst_17 = arith.constant 1.000000e+00 : bf16
    %39 = vector.broadcast %cst_17 : bf16 to vector<128x128xbf16>
    %40 = arith.addf %38, %39 : vector<128x128xbf16>
    %cst_18 = arith.constant 5.000000e-01 : bf16
    %41 = vector.broadcast %cst_18 : bf16 to vector<128x128xbf16>
    %42 = arith.mulf %41, %40 : vector<128x128xbf16>
    %43 = arith.mulf %35, %42 : vector<128x128xbf16>
    %c0_19 = arith.constant 0 : index
    %c0_20 = arith.constant 0 : index
    %44 = vector.load %arg7[%c0_19, %c0_20] : memref<128x128xbf16, #tpu.memory_space<vmem>>, vector<128x128xbf16>
    %cst_21 = arith.constant dense<0.000000e+00> : vector<128x128xf32>
    %45 = tpu.matmul %43, %44, %cst_21 {dimension_numbers = #tpu.dot_dimension_numbers<[1], [0], [0], [1], [0, 0, 1, 1], [], []>} : vector<128x128xbf16>, vector<128x128xbf16>, vector<128x128xf32> -> vector<128x128xf32>
    %46 = arith.truncf %45 : vector<128x128xf32> to vector<128x128xbf16>
    %c0_22 = arith.constant 0 : index
    %c0_23 = arith.constant 0 : index
    %47 = vector.load %arg8[%c0_22, %c0_23] : memref<1x128xbf16, #tpu.memory_space<vmem>>, vector<1x128xbf16>
    %48 = vector.broadcast %47 : vector<1x128xbf16> to vector<128x128xbf16>
    %49 = arith.addf %46, %48 : vector<128x128xbf16>
    %cst_24 = arith.constant 5.000000e-01 : bf16
    %50 = vector.broadcast %cst_24 : bf16 to vector<128x128xbf16>
    %51 = arith.mulf %49, %50 : vector<128x128xbf16>
    %52 = math.tanh %51 : vector<128x128xbf16>
    %cst_25 = arith.constant 1.000000e+00 : bf16
    %53 = vector.broadcast %cst_25 : bf16 to vector<128x128xbf16>
    %54 = arith.addf %52, %53 : vector<128x128xbf16>
    %cst_26 = arith.constant 5.000000e-01 : bf16
    %55 = vector.broadcast %cst_26 : bf16 to vector<128x128xbf16>
    %56 = arith.mulf %55, %54 : vector<128x128xbf16>
    %57 = arith.mulf %49, %56 : vector<128x128xbf16>
    %c0_27 = arith.constant 0 : index
    %c0_28 = arith.constant 0 : index
    %58 = vector.load %arg9[%c0_27, %c0_28] : memref<128x128xbf16, #tpu.memory_space<vmem>>, vector<128x128xbf16>
    %cst_29 = arith.constant dense<0.000000e+00> : vector<128x128xf32>
    %59 = tpu.matmul %57, %58, %cst_29 {dimension_numbers = #tpu.dot_dimension_numbers<[1], [0], [0], [1], [0, 0, 1, 1], [], []>} : vector<128x128xbf16>, vector<128x128xbf16>, vector<128x128xf32> -> vector<128x128xf32>
    %60 = arith.truncf %59 : vector<128x128xf32> to vector<128x128xbf16>
    %c0_30 = arith.constant 0 : index
    %c0_31 = arith.constant 0 : index
    %61 = vector.load %arg10[%c0_30, %c0_31] : memref<1x128xbf16, #tpu.memory_space<vmem>>, vector<1x128xbf16>
    %62 = vector.broadcast %61 : vector<1x128xbf16> to vector<128x128xbf16>
    %63 = arith.addf %60, %62 : vector<128x128xbf16>
    %cst_32 = arith.constant 5.000000e-01 : bf16
    %64 = vector.broadcast %cst_32 : bf16 to vector<128x128xbf16>
    %65 = arith.mulf %63, %64 : vector<128x128xbf16>
    %66 = math.tanh %65 : vector<128x128xbf16>
    %cst_33 = arith.constant 1.000000e+00 : bf16
    %67 = vector.broadcast %cst_33 : bf16 to vector<128x128xbf16>
    %68 = arith.addf %66, %67 : vector<128x128xbf16>
    %cst_34 = arith.constant 5.000000e-01 : bf16
    %69 = vector.broadcast %cst_34 : bf16 to vector<128x128xbf16>
    %70 = arith.mulf %69, %68 : vector<128x128xbf16>
    %71 = arith.mulf %63, %70 : vector<128x128xbf16>
    %c0_35 = arith.constant 0 : index
    %c0_36 = arith.constant 0 : index
    %72 = vector.load %arg11[%c0_35, %c0_36] : memref<128x2xbf16, #tpu.memory_space<vmem>>, vector<128x2xbf16>
    %cst_37 = arith.constant dense<0.000000e+00> : vector<128x2xf32>
    %73 = tpu.matmul %71, %72, %cst_37 {dimension_numbers = #tpu.dot_dimension_numbers<[1], [0], [0], [1], [0, 0, 1, 1], [], []>} : vector<128x128xbf16>, vector<128x2xbf16>, vector<128x2xf32> -> vector<128x2xf32>
    %c0_38 = arith.constant 0 : index
    %c0_39 = arith.constant 0 : index
    %74 = vector.load %arg12[%c0_38, %c0_39] : memref<1x2xf32, #tpu.memory_space<vmem>>, vector<1x2xf32>
    %75 = vector.broadcast %74 : vector<1x2xf32> to vector<128x2xf32>
    %76 = arith.addf %73, %75 : vector<128x2xf32>
    %c0_40 = arith.constant 0 : index
    %c0_41 = arith.constant 0 : index
    %77 = vector.load %arg13[%c0_40, %c0_41] : memref<128x2xf32, #tpu.memory_space<vmem>>, vector<128x2xf32>
    tpu.vector_store %arg13[%c0_40, %c0_41], %76 {strides = array<i32>} : memref<128x2xf32, #tpu.memory_space<vmem>>, vector<128x2xf32>,
    return
  }
  func.func @transform_0(%arg0: i32) -> (i32, i32) {
    %c0_i32 = arith.constant 0 : i32
    %c0_i32_0 = arith.constant 0 : i32
    return %arg0, %c0_i32 : i32, i32
  }
  func.func @transform_1(%arg0: i32) -> (i32, i32) {
    %c0_i32 = arith.constant 0 : i32
    %c0_i32_0 = arith.constant 0 : i32
    return %arg0, %c0_i32 : i32, i32
  }
  func.func @transform_2(%arg0: i32) -> (i32, i32) {
    %c0_i32 = arith.constant 0 : i32
    %c0_i32_0 = arith.constant 0 : i32
    %c0_i32_1 = arith.constant 0 : i32
    return %c0_i32, %c0_i32_0 : i32, i32
  }
  func.func @transform_3(%arg0: i32) -> (i32, i32) {
    %c0_i32 = arith.constant 0 : i32
    %c0_i32_0 = arith.constant 0 : i32
    %c0_i32_1 = arith.constant 0 : i32
    return %c0_i32, %c0_i32_0 : i32, i32
  }
  func.func @transform_4(%arg0: i32) -> (i32, i32) {
    %c0_i32 = arith.constant 0 : i32
    %c0_i32_0 = arith.constant 0 : i32
    %c0_i32_1 = arith.constant 0 : i32
    return %c0_i32, %c0_i32_0 : i32, i32
  }
  func.func @transform_5(%arg0: i32) -> (i32, i32) {
    %c0_i32 = arith.constant 0 : i32
    %c0_i32_0 = arith.constant 0 : i32
    %c0_i32_1 = arith.constant 0 : i32
    return %c0_i32, %c0_i32_0 : i32, i32
  }
  func.func @transform_6(%arg0: i32) -> (i32, i32) {
    %c0_i32 = arith.constant 0 : i32
    %c0_i32_0 = arith.constant 0 : i32
    %c0_i32_1 = arith.constant 0 : i32
    return %c0_i32, %c0_i32_0 : i32, i32
  }
  func.func @transform_7(%arg0: i32) -> (i32, i32) {
    %c0_i32 = arith.constant 0 : i32
    %c0_i32_0 = arith.constant 0 : i32
    %c0_i32_1 = arith.constant 0 : i32
    return %c0_i32, %c0_i32_0 : i32, i32
  }
  func.func @transform_8(%arg0: i32) -> (i32, i32) {
    %c0_i32 = arith.constant 0 : i32
    %c0_i32_0 = arith.constant 0 : i32
    %c0_i32_1 = arith.constant 0 : i32
    return %c0_i32, %c0_i32_0 : i32, i32
  }
  func.func @transform_9(%arg0: i32) -> (i32, i32) {
    %c0_i32 = arith.constant 0 : i32
    %c0_i32_0 = arith.constant 0 : i32
    %c0_i32_1 = arith.constant 0 : i32
    return %c0_i32, %c0_i32_0 : i32, i32
  }
  func.func @transform_10(%arg0: i32) -> (i32, i32) {
    %c0_i32 = arith.constant 0 : i32
    %c0_i32_0 = arith.constant 0 : i32
    %c0_i32_1 = arith.constant 0 : i32
    return %c0_i32, %c0_i32_0 : i32, i32
  }
  func.func @transform_11(%arg0: i32) -> (i32, i32) {
    %c0_i32 = arith.constant 0 : i32
    %c0_i32_0 = arith.constant 0 : i32
    %c0_i32_1 = arith.constant 0 : i32
    return %c0_i32, %c0_i32_0 : i32, i32
  }
  func.func @transform_12(%arg0: i32) -> (i32, i32) {
    %c0_i32 = arith.constant 0 : i32
    %c0_i32_0 = arith.constant 0 : i32
    return %arg0, %c0_i32 : i32, i32
  }
}

</mosaic_0001>

<llo_original>
// kernel: mlp_forward.1
$region0: #{mlp_forward.1}
  #allocation0 [shape = 'u32[]', space=smem, size = 0x4, offset = 0x4, fixed_abs, tag = 'smem constant byte address 0x4 - core index']
  #allocation1 [shape = 'u32[144,128]{1,0:T(1,128)}', space=vmem, size = 0x12000, scoped, tag = 'internal scratch']
  %s0 = inlined_call_operand.vmem [shape: f32[256,2], index: 0, kind: input, shape index: {}]
  %s1 = inlined_call_operand.vmem [shape: f32[256,1], index: 1, kind: input, shape index: {}]
  %s2 = inlined_call_operand.vmem [shape: f32[3,128], index: 2, kind: input, shape index: {}]
  %s3 = inlined_call_operand.vmem [shape: f32[1,128], index: 3, kind: input, shape index: {}]
  %s4 = inlined_call_operand.vmem [shape: bf16[128,128], index: 4, kind: input, shape index: {}]
  %s5 = inlined_call_operand.vmem [shape: bf16[1,128], index: 5, kind: input, shape index: {}]
  %s6 = inlined_call_operand.vmem [shape: bf16[128,128], index: 6, kind: input, shape index: {}]
  %s7 = inlined_call_operand.vmem [shape: bf16[1,128], index: 7, kind: input, shape index: {}]
  %s8 = inlined_call_operand.vmem [shape: bf16[128,128], index: 8, kind: input, shape index: {}]
  %s9 = inlined_call_operand.vmem [shape: bf16[1,128], index: 9, kind: input, shape index: {}]
  %s10 = inlined_call_operand.vmem [shape: bf16[128,2], index: 10, kind: input, shape index: {}]
  %s11 = inlined_call_operand.vmem [shape: f32[1,2], index: 11, kind: input, shape index: {}]
  %s12 = inlined_call_operand.vmem [shape: f32[256,2], index: 12, kind: output, shape index: {}]
  %s13 = sld [smem:[#allocation0]]
  $region81: #{mlp_forward.1} parent=0
    _
  %s15 = ssub.s32 1, %s13
  %s16 = scalar_select 0, %s15, %s13
  loop: start=0, step=1, limit=4
  $region2: #{mlp_forward.1} parent=0 // loop_pre_header
    _
  $region3: #{mlp_forward.1} parent=0 // loop_header
    %s18 = sphi 0, %s22
    %p19 = scmp.ge.s32.totalorder %s18, 4
    %s28 = sphi 0, %s30
    %s31 = sphi 0, %s28
    %s32 = sphi 0, %s31
    %s48 = sphi 0, %s32
    %s54 = sphi 0, %s56
    %s57 = sphi 0, %s54
    %s58 = sphi 0, %s57
    %s74 = sphi 0, %s58
    %s78 = sphi 0, %s78
    %s80 = sphi 0, %s78
    %s81 = sphi 0, %s80
    %s95 = sphi 0, %s81
    %s99 = sphi 0, %s99
    %s101 = sphi 0, %s99
    %s102 = sphi 0, %s101
    %s116 = sphi 0, %s102
    %s120 = sphi 0, %s120
    %s122 = sphi 0, %s120
    %s123 = sphi 0, %s122
    %s137 = sphi 0, %s123
    %s141 = sphi 0, %s141
    %s143 = sphi 0, %s141
    %s144 = sphi 0, %s143
    %s158 = sphi 0, %s144
    %s162 = sphi 0, %s162
    %s164 = sphi 0, %s162
    %s165 = sphi 0, %s164
    %s179 = sphi 0, %s165
    %s183 = sphi 0, %s183
    %s185 = sphi 0, %s183
    %s186 = sphi 0, %s185
    %s200 = sphi 0, %s186
    %s204 = sphi 0, %s204
    %s206 = sphi 0, %s204
    %s207 = sphi 0, %s206
    %s221 = sphi 0, %s207
    %s225 = sphi 0, %s225
    %s227 = sphi 0, %s225
    %s228 = sphi 0, %s227
    %s242 = sphi 0, %s228
    %s246 = sphi 0, %s246
    %s248 = sphi 0, %s246
    %s249 = sphi 0, %s248
    %s263 = sphi 0, %s249
    %s267 = sphi 0, %s267
    %s269 = sphi 0, %s267
    %s270 = sphi 0, %s269
    %s284 = sphi 0, %s270
    %s290 = sphi 0, %s292
    %s293 = sphi 0, %s290
    %s294 = sphi 0, %s293
    %s310 = sphi 0, %s294
  $region4: #{mlp_forward.1} parent=0 // loop_header_branch
    %21 = sbr.rel (%p19) target = $region8
  $region5: #{mlp_forward.1} parent=0 // loop_body
    %s23 = ssub.s32 %s18, 1
    %s24 = ssub.s32 %s18, 2
    %s25 = sadd.s32 %s18, 1
    %s26 = ssub.s32 %s18, %s25
    %p27 = scmp.eq.s32.totalorder %s26, 0
    %s29 = sadd.s32 %s28, 1
    %s30 = scalar_select %p27, %s28, %s29
    %p33 = pneg %p27
    %p34 = scmp.eq.s32.totalorder %s18, 1
    %p35 = por %p33, %p34
    %p36 = scmp.ne.s32.totalorder %s28, %s31
    %p37 = scmp.eq.s32.totalorder %s18, 0
    %p38 = por %p36, %p37
    %p39 = scmp.ne.s32.totalorder %s28, %s31
    %p40 = scmp.eq.s32.totalorder %s23, 1
    %p41 = por %p39, %p40
    %p42 = scmp.ne.s32.totalorder %s31, %s32
    %p43 = scmp.eq.s32.totalorder %s23, 0
    %p44 = por %p42, %p43
    %p45 = scmp.ne.s32.totalorder %s31, %s32
    %p46 = scmp.eq.s32.totalorder %s24, 1
    %p47 = por %p45, %p46
    %p49 = scmp.ne.s32.totalorder %s32, %s48
    %p50 = scmp.eq.s32.totalorder %s24, 0
    %p51 = por %p49, %p50
    %s52 = ssub.s32 %s18, %s25
    %p53 = scmp.eq.s32.totalorder %s52, 0
    %s55 = sadd.s32 %s54, 1
    %s56 = scalar_select %p53, %s54, %s55
    %p59 = pneg %p53
    %p60 = scmp.eq.s32.totalorder %s18, 1
    %p61 = por %p59, %p60
    %p62 = scmp.ne.s32.totalorder %s54, %s57
    %p63 = scmp.eq.s32.totalorder %s18, 0
    %p64 = por %p62, %p63
    %p65 = scmp.ne.s32.totalorder %s54, %s57
    %p66 = scmp.eq.s32.totalorder %s23, 1
    %p67 = por %p65, %p66
    %p68 = scmp.ne.s32.totalorder %s57, %s58
    %p69 = scmp.eq.s32.totalorder %s23, 0
    %p70 = por %p68, %p69
    %p71 = scmp.ne.s32.totalorder %s57, %s58
    %p72 = scmp.eq.s32.totalorder %s24, 1
    %p73 = por %p71, %p72
    %p75 = scmp.ne.s32.totalorder %s58, %s74
    %p76 = scmp.eq.s32.totalorder %s24, 0
    %p77 = por %p75, %p76
    %s79 = sadd.s32 %s78, 1
    %p82 = scmp.eq.s32.totalorder %s18, 1
    %p83 = scmp.ne.s32.totalorder %s78, %s80
    %p84 = scmp.eq.s32.totalorder %s18, 0
    %p85 = por %p83, %p84
    %p86 = scmp.ne.s32.totalorder %s78, %s80
    %p87 = scmp.eq.s32.totalorder %s23, 1
    %p88 = por %p86, %p87
    %p89 = scmp.ne.s32.totalorder %s80, %s81
    %p90 = scmp.eq.s32.totalorder %s23, 0
    %p91 = por %p89, %p90
    %p92 = scmp.ne.s32.totalorder %s80, %s81
    %p93 = scmp.eq.s32.totalorder %s24, 1
    %p94 = por %p92, %p93
    %p96 = scmp.ne.s32.totalorder %s81, %s95
    %p97 = scmp.eq.s32.totalorder %s24, 0
    %p98 = por %p96, %p97
    %s100 = sadd.s32 %s99, 1
    %p103 = scmp.eq.s32.totalorder %s18, 1
    %p104 = scmp.ne.s32.totalorder %s99, %s101
    %p105 = scmp.eq.s32.totalorder %s18, 0
    %p106 = por %p104, %p105
    %p107 = scmp.ne.s32.totalorder %s99, %s101
    %p108 = scmp.eq.s32.totalorder %s23, 1
    %p109 = por %p107, %p108
    %p110 = scmp.ne.s32.totalorder %s101, %s102
    %p111 = scmp.eq.s32.totalorder %s23, 0
    %p112 = por %p110, %p111
    %p113 = scmp.ne.s32.totalorder %s101, %s102
    %p114 = scmp.eq.s32.totalorder %s24, 1
    %p115 = por %p113, %p114
    %p117 = scmp.ne.s32.totalorder %s102, %s116
    %p118 = scmp.eq.s32.totalorder %s24, 0
    %p119 = por %p117, %p118
    %s121 = sadd.s32 %s120, 1
    %p124 = scmp.eq.s32.totalorder %s18, 1
    %p125 = scmp.ne.s32.totalorder %s120, %s122
    %p126 = scmp.eq.s32.totalorder %s18, 0
    %p127 = por %p125, %p126
    %p128 = scmp.ne.s32.totalorder %s120, %s122
    %p129 = scmp.eq.s32.totalorder %s23, 1
    %p130 = por %p128, %p129
    %p131 = scmp.ne.s32.totalorder %s122, %s123
    %p132 = scmp.eq.s32.totalorder %s23, 0
    %p133 = por %p131, %p132
    %p134 = scmp.ne.s32.totalorder %s122, %s123
    %p135 = scmp.eq.s32.totalorder %s24, 1
    %p136 = por %p134, %p135
    %p138 = scmp.ne.s32.totalorder %s123, %s137
    %p139 = scmp.eq.s32.totalorder %s24, 0
    %p140 = por %p138, %p139
    %s142 = sadd.s32 %s141, 1
    %p145 = scmp.eq.s32.totalorder %s18, 1
    %p146 = scmp.ne.s32.totalorder %s141, %s143
    %p147 = scmp.eq.s32.totalorder %s18, 0
    %p148 = por %p146, %p147
    %p149 = scmp.ne.s32.totalorder %s141, %s143
    %p150 = scmp.eq.s32.totalorder %s23, 1
    %p151 = por %p149, %p150
    %p152 = scmp.ne.s32.totalorder %s143, %s144
    %p153 = scmp.eq.s32.totalorder %s23, 0
    %p154 = por %p152, %p153
    %p155 = scmp.ne.s32.totalorder %s143, %s144
    %p156 = scmp.eq.s32.totalorder %s24, 1
    %p157 = por %p155, %p156
    %p159 = scmp.ne.s32.totalorder %s144, %s158
    %p160 = scmp.eq.s32.totalorder %s24, 0
    %p161 = por %p159, %p160
    %s163 = sadd.s32 %s162, 1
    %p166 = scmp.eq.s32.totalorder %s18, 1
    %p167 = scmp.ne.s32.totalorder %s162, %s164
    %p168 = scmp.eq.s32.totalorder %s18, 0
    %p169 = por %p167, %p168
    %p170 = scmp.ne.s32.totalorder %s162, %s164
    %p171 = scmp.eq.s32.totalorder %s23, 1
    %p172 = por %p170, %p171
    %p173 = scmp.ne.s32.totalorder %s164, %s165
    %p174 = scmp.eq.s32.totalorder %s23, 0
    %p175 = por %p173, %p174
    %p176 = scmp.ne.s32.totalorder %s164, %s165
    %p177 = scmp.eq.s32.totalorder %s24, 1
    %p178 = por %p176, %p177
    %p180 = scmp.ne.s32.totalorder %s165, %s179
    %p181 = scmp.eq.s32.totalorder %s24, 0
    %p182 = por %p180, %p181
    %s184 = sadd.s32 %s183, 1
    %p187 = scmp.eq.s32.totalorder %s18, 1
    %p188 = scmp.ne.s32.totalorder %s183, %s185
    %p189 = scmp.eq.s32.totalorder %s18, 0
    %p190 = por %p188, %p189
    %p191 = scmp.ne.s32.totalorder %s183, %s185
    %p192 = scmp.eq.s32.totalorder %s23, 1
    %p193 = por %p191, %p192
    %p194 = scmp.ne.s32.totalorder %s185, %s186
    %p195 = scmp.eq.s32.totalorder %s23, 0
    %p196 = por %p194, %p195
    %p197 = scmp.ne.s32.totalorder %s185, %s186
    %p198 = scmp.eq.s32.totalorder %s24, 1
    %p199 = por %p197, %p198
    %p201 = scmp.ne.s32.totalorder %s186, %s200
    %p202 = scmp.eq.s32.totalorder %s24, 0
    %p203 = por %p201, %p202
    %s205 = sadd.s32 %s204, 1
    %p208 = scmp.eq.s32.totalorder %s18, 1
    %p209 = scmp.ne.s32.totalorder %s204, %s206
    %p210 = scmp.eq.s32.totalorder %s18, 0
    %p211 = por %p209, %p210
    %p212 = scmp.ne.s32.totalorder %s204, %s206
    %p213 = scmp.eq.s32.totalorder %s23, 1
    %p214 = por %p212, %p213
    %p215 = scmp.ne.s32.totalorder %s206, %s207
    %p216 = scmp.eq.s32.totalorder %s23, 0
    %p217 = por %p215, %p216
    %p218 = scmp.ne.s32.totalorder %s206, %s207
    %p219 = scmp.eq.s32.totalorder %s24, 1
    %p220 = por %p218, %p219
    %p222 = scmp.ne.s32.totalorder %s207, %s221
    %p223 = scmp.eq.s32.totalorder %s24, 0
    %p224 = por %p222, %p223
    %s226 = sadd.s32 %s225, 1
    %p229 = scmp.eq.s32.totalorder %s18, 1
    %p230 = scmp.ne.s32.totalorder %s225, %s227
    %p231 = scmp.eq.s32.totalorder %s18, 0
    %p232 = por %p230, %p231
    %p233 = scmp.ne.s32.totalorder %s225, %s227
    %p234 = scmp.eq.s32.totalorder %s23, 1
    %p235 = por %p233, %p234
    %p236 = scmp.ne.s32.totalorder %s227, %s228
    %p237 = scmp.eq.s32.totalorder %s23, 0
    %p238 = por %p236, %p237
    %p239 = scmp.ne.s32.totalorder %s227, %s228
    %p240 = scmp.eq.s32.totalorder %s24, 1
    %p241 = por %p239, %p240
    %p243 = scmp.ne.s32.totalorder %s228, %s242
    %p244 = scmp.eq.s32.totalorder %s24, 0
    %p245 = por %p243, %p244
    %s247 = sadd.s32 %s246, 1
    %p250 = scmp.eq.s32.totalorder %s18, 1
    %p251 = scmp.ne.s32.totalorder %s246, %s248
    %p252 = scmp.eq.s32.totalorder %s18, 0
    %p253 = por %p251, %p252
    %p254 = scmp.ne.s32.totalorder %s246, %s248
    %p255 = scmp.eq.s32.totalorder %s23, 1
    %p256 = por %p254, %p255
    %p257 = scmp.ne.s32.totalorder %s248, %s249
    %p258 = scmp.eq.s32.totalorder %s23, 0
    %p259 = por %p257, %p258
    %p260 = scmp.ne.s32.totalorder %s248, %s249
    %p261 = scmp.eq.s32.totalorder %s24, 1
    %p262 = por %p260, %p261
    %p264 = scmp.ne.s32.totalorder %s249, %s263
    %p265 = scmp.eq.s32.totalorder %s24, 0
    %p266 = por %p264, %p265
    %s268 = sadd.s32 %s267, 1
    %p271 = scmp.eq.s32.totalorder %s18, 1
    %p272 = scmp.ne.s32.totalorder %s267, %s269
    %p273 = scmp.eq.s32.totalorder %s18, 0
    %p274 = por %p272, %p273
    %p275 = scmp.ne.s32.totalorder %s267, %s269
    %p276 = scmp.eq.s32.totalorder %s23, 1
    %p277 = por %p275, %p276
    %p278 = scmp.ne.s32.totalorder %s269, %s270
    %p279 = scmp.eq.s32.totalorder %s23, 0
    %p280 = por %p278, %p279
    %p281 = scmp.ne.s32.totalorder %s269, %s270
    %p282 = scmp.eq.s32.totalorder %s24, 1
    %p283 = por %p281, %p282
    %p285 = scmp.ne.s32.totalorder %s270, %s284
    %p286 = scmp.eq.s32.totalorder %s24, 0
    %p287 = por %p285, %p286
    %s288 = ssub.s32 %s18, %s25
    %p289 = scmp.eq.s32.totalorder %s288, 0
    %s291 = sadd.s32 %s290, 1
    %s292 = scalar_select %p289, %s290, %s291
    %p295 = pneg %p289
    %p296 = scmp.eq.s32.totalorder %s18, 1
    %p297 = por %p295, %p296
    %p298 = scmp.ne.s32.totalorder %s290, %s293
    %p299 = scmp.eq.s32.totalorder %s18, 0
    %p300 = por %p298, %p299
    %p301 = scmp.ne.s32.totalorder %s290, %s293
    %p302 = scmp.eq.s32.totalorder %s23, 1
    %p303 = por %p301, %p302
    %p304 = scmp.ne.s32.totalorder %s293, %s294
    %p305 = scmp.eq.s32.totalorder %s23, 0
    %p306 = por %p304, %p305
    %p307 = scmp.ne.s32.totalorder %s293, %s294
    %p308 = scmp.eq.s32.totalorder %s24, 1
    %p309 = por %p307, %p308
    %p311 = scmp.ne.s32.totalorder %s294, %s310
    %p312 = scmp.eq.s32.totalorder %s24, 0
    %p313 = por %p311, %p312
    %p314 = scmp.le.s32.totalorder 1, %s18
    %p315 = scmp.lt.s32.totalorder %s18, 3
    %p316 = pnand %p314, %p315
    %p317 = pneg %p316
    // Predicated region
    $region9: #{mlp_forward.1} parent=5 // pred_check
      _
    $region10: #{mlp_forward.1} parent=5 // pred_check_branch
      %319 = sbr.rel (%p316) target = $region12
    $region11: #{mlp_forward.1} parent=5 // pred_region
      %s320 = ssub.s32 %s18, 1
      // Predicated region
      $region13: #{mlp_forward.1} parent=11 // pred_check
        %p321 = pneg %p91
      $region14: #{mlp_forward.1} parent=11 // pred_check_branch
        %323 = sbr.rel (%p321) target = $region16
      $region15: #{mlp_forward.1} parent=11 // pred_region
        _
      $region16: #{mlp_forward.1} parent=11 // pred_fallthru
        _
      // Predicated region
      $region17: #{mlp_forward.1} parent=11 // pred_check
        %p324 = pneg %p112
      $region18: #{mlp_forward.1} parent=11 // pred_check_branch
        %326 = sbr.rel (%p324) target = $region20
      $region19: #{mlp_forward.1} parent=11 // pred_region
        _
      $region20: #{mlp_forward.1} parent=11 // pred_fallthru
        _
      // Predicated region
      $region21: #{mlp_forward.1} parent=11 // pred_check
        %p327 = pneg %p133
      $region22: #{mlp_forward.1} parent=11 // pred_check_branch
        %329 = sbr.rel (%p327) target = $region24
      $region23: #{mlp_forward.1} parent=11 // pred_region
        _
      $region24: #{mlp_forward.1} parent=11 // pred_fallthru
        _
      // Predicated region
      $region25: #{mlp_forward.1} parent=11 // pred_check
        %p330 = pneg %p154
      $region26: #{mlp_forward.1} parent=11 // pred_check_branch
        %332 = sbr.rel (%p330) target = $region28
      $region27: #{mlp_forward.1} parent=11 // pred_region
        _
      $region28: #{mlp_forward.1} parent=11 // pred_fallthru
        _
      // Predicated region
      $region29: #{mlp_forward.1} parent=11 // pred_check
        %p333 = pneg %p175
      $region30: #{mlp_forward.1} parent=11 // pred_check_branch
        %335 = sbr.rel (%p333) target = $region32
      $region31: #{mlp_forward.1} parent=11 // pred_region
        _
      $region32: #{mlp_forward.1} parent=11 // pred_fallthru
        _
      // Predicated region
      $region33: #{mlp_forward.1} parent=11 // pred_check
        %p336 = pneg %p196
      $region34: #{mlp_forward.1} parent=11 // pred_check_branch
        %338 = sbr.rel (%p336) target = $region36
      $region35: #{mlp_forward.1} parent=11 // pred_region
        _
      $region36: #{mlp_forward.1} parent=11 // pred_fallthru
        _
      // Predicated region
      $region37: #{mlp_forward.1} parent=11 // pred_check
        %p339 = pneg %p217
      $region38: #{mlp_forward.1} parent=11 // pred_check_branch
        %341 = sbr.rel (%p339) target = $region40
      $region39: #{mlp_forward.1} parent=11 // pred_region
        _
      $region40: #{mlp_forward.1} parent=11 // pred_fallthru
        _
      // Predicated region
      $region41: #{mlp_forward.1} parent=11 // pred_check
        %p342 = pneg %p238
      $region42: #{mlp_forward.1} parent=11 // pred_check_branch
        %344 = sbr.rel (%p342) target = $region44
      $region43: #{mlp_forward.1} parent=11 // pred_region
        _
      $region44: #{mlp_forward.1} parent=11 // pred_fallthru
        _
      // Predicated region
      $region45: #{mlp_forward.1} parent=11 // pred_check
        %p345 = pneg %p259
      $region46: #{mlp_forward.1} parent=11 // pred_check_branch
        %347 = sbr.rel (%p345) target = $region48
      $region47: #{mlp_forward.1} parent=11 // pred_region
        _
      $region48: #{mlp_forward.1} parent=11 // pred_fallthru
        _
      // Predicated region
      $region49: #{mlp_forward.1} parent=11 // pred_check
        %p348 = pneg %p280
      $region50: #{mlp_forward.1} parent=11 // pred_check_branch
        %350 = sbr.rel (%p348) target = $region52
      $region51: #{mlp_forward.1} parent=11 // pred_region
        _
      $region52: #{mlp_forward.1} parent=11 // pred_fallthru
        _
    $region12: #{mlp_forward.1} parent=5 // pred_fallthru
      _
    %p351 = scmp.lt.s32.totalorder %s18, 2
    // Predicated region
    $region53: #{mlp_forward.1} parent=5 // pred_check
      %p352 = pneg %p351
    $region54: #{mlp_forward.1} parent=5 // pred_check_branch
      %354 = sbr.rel (%p352) target = $region56
    $region55: #{mlp_forward.1} parent=5 // pred_region
      // Predicated region
      $region57: #{mlp_forward.1} parent=55 // pred_check
        %p355 = pneg %p38
      $region58: #{mlp_forward.1} parent=55 // pred_check_branch
        %357 = sbr.rel (%p355) target = $region60
      $region59: #{mlp_forward.1} parent=55 // pred_region
        %s358 = smul.u32 16, %s18
        %p359 = scmp.lt.s32.totalorder %s358, 31
        %s360 = scalar_select %p359, %s358, 31
        %s361 = smul.addr %s360, 8
        %s362 = scalar_lea.vmem %s0, %s361
        %s363 = smul.u32 16, %s18
      $region60: #{mlp_forward.1} parent=55 // pred_fallthru
        _
      // Predicated region
      $region61: #{mlp_forward.1} parent=55 // pred_check
        %p364 = pneg %p64
      $region62: #{mlp_forward.1} parent=55 // pred_check_branch
        %366 = sbr.rel (%p364) target = $region64
      $region63: #{mlp_forward.1} parent=55 // pred_region
        %s367 = smul.u32 16, %s18
        %p368 = scmp.lt.s32.totalorder %s367, 31
        %s369 = scalar_select %p368, %s367, 31
        %s370 = smul.addr %s369, 8
        %s371 = scalar_lea.vmem %s1, %s370
        %s372 = smul.u32 16, %s18
      $region64: #{mlp_forward.1} parent=55 // pred_fallthru
        _
    $region56: #{mlp_forward.1} parent=5 // pred_fallthru
      _
    %p373 = scmp.le.s32.totalorder 1, %s18
    %p374 = scmp.lt.s32.totalorder %s18, 3
    %p375 = pnand %p373, %p374
    %p376 = pneg %p375
    // Predicated region
    $region65: #{mlp_forward.1} parent=5 // pred_check
      _
    $region66: #{mlp_forward.1} parent=5 // pred_check_branch
      %378 = sbr.rel (%p375) target = $region68
    $region67: #{mlp_forward.1} parent=5 // pred_region
      %s379 = ssub.s32 %s18, 1
      %s380 = smul.u32 16, %s23
      %p381 = scmp.lt.s32.totalorder %s380, 31
      %s382 = scalar_select %p381, %s380, 31
      %s383 = smul.addr %s382, 8
      %s384 = scalar_lea.vmem %s0, %s383
      %p385 = pneg %p44
      %p386 = pneg %p41
      %s387 = smul.u32 16, %s23
      %p388 = scmp.lt.s32.totalorder %s387, 31
      %s389 = scalar_select %p388, %s387, 31
      %s390 = smul.addr %s389, 8
      %s391 = scalar_lea.vmem %s1, %s390
      %p392 = pneg %p70
      %p393 = pneg %p67
      %p394 = pneg %p91
      %p395 = pneg %p88
      %p396 = pneg %p112
      %p397 = pneg %p109
      %p398 = pneg %p133
      %p399 = pneg %p130
      %p400 = pneg %p154
      %p401 = pneg %p151
      %p402 = pneg %p175
      %p403 = pneg %p172
      %p404 = pneg %p196
      %p405 = pneg %p193
      %p406 = pneg %p217
      %p407 = pneg %p214
      %p408 = pneg %p238
      %p409 = pneg %p235
      %p410 = pneg %p259
      %p411 = pneg %p256
      %p412 = pneg %p280
      %p413 = pneg %p277
      %p414 = pneg %p306
      %p415 = pneg %p303
      %s416 = smul.u32 16, %s23
      %p417 = scmp.lt.s32.totalorder %s416, 31
      %s418 = scalar_select %p417, %s416, 31
      %s419 = smul.addr %s418, 8
      %s420 = scalar_lea.vmem %s12, %s419
      %s421 = smul.u32 16, %s23
      %p422 = scmp.lt.s32.totalorder %s421, 31
      %s423 = scalar_select %p422, %s421, 31
      %s424 = smul.addr %s423, 8
      %s425 = scalar_lea.vmem %s0, %s424
      %s426 = smul.u32 16, %s23
      %s427 = smul.u32 16, %s23
      %p428 = scmp.lt.s32.totalorder %s427, 31
      %s429 = scalar_select %p428, %s427, 31
      %s430 = smul.addr %s429, 8
      %s431 = scalar_lea.vmem %s1, %s430
      %s432 = smul.u32 16, %s23
      %s433 = smul.u32 16, %s23
      %p434 = scmp.lt.s32.totalorder %s433, 31
      %s435 = scalar_select %p434, %s433, 31
      %s436 = smul.addr %s435, 8
      %s437 = scalar_lea.vmem %s12, %s436
      %s438 = smul.u32 16, %s23
      %v442 = vld [vmem:[%s425] sm:$0xff]
      %v443 = vld [vmem:[%s425 + $0x8] sm:$0xff]
      %v444 = vld [vmem:[%s425 + $0x10] sm:$0xff]
      %v445 = vld [vmem:[%s425 + $0x18] sm:$0xff]
      %v446 = vld [vmem:[%s425 + $0x20] sm:$0xff]
      %v447 = vld [vmem:[%s425 + $0x28] sm:$0xff]
      %v448 = vld [vmem:[%s425 + $0x30] sm:$0xff]
      %v449 = vld [vmem:[%s425 + $0x38] sm:$0xff]
      %v450 = vld [vmem:[%s425 + $0x40] sm:$0xff]
      %v451 = vld [vmem:[%s425 + $0x48] sm:$0xff]
      %v452 = vld [vmem:[%s425 + $0x50] sm:$0xff]
      %v453 = vld [vmem:[%s425 + $0x58] sm:$0xff]
      %v454 = vld [vmem:[%s425 + $0x60] sm:$0xff]
      %v455 = vld [vmem:[%s425 + $0x68] sm:$0xff]
      %v456 = vld [vmem:[%s425 + $0x70] sm:$0xff]
      %v457 = vld [vmem:[%s425 + $0x78] sm:$0xff]
      %v458 = vld [vmem:[%s431] sm:$0xff]
      %v459 = vld [vmem:[%s431 + $0x8] sm:$0xff]
      %v460 = vld [vmem:[%s431 + $0x10] sm:$0xff]
      %v461 = vld [vmem:[%s431 + $0x18] sm:$0xff]
      %v462 = vld [vmem:[%s431 + $0x20] sm:$0xff]
      %v463 = vld [vmem:[%s431 + $0x28] sm:$0xff]
      %v464 = vld [vmem:[%s431 + $0x30] sm:$0xff]
      %v465 = vld [vmem:[%s431 + $0x38] sm:$0xff]
      %v466 = vld [vmem:[%s431 + $0x40] sm:$0xff]
      %v467 = vld [vmem:[%s431 + $0x48] sm:$0xff]
      %v468 = vld [vmem:[%s431 + $0x50] sm:$0xff]
      %v469 = vld [vmem:[%s431 + $0x58] sm:$0xff]
      %v470 = vld [vmem:[%s431 + $0x60] sm:$0xff]
      %v471 = vld [vmem:[%s431 + $0x68] sm:$0xff]
      %v472 = vld [vmem:[%s431 + $0x70] sm:$0xff]
      %v473 = vld [vmem:[%s431 + $0x78] sm:$0xff]
      %v474 = vld [vmem:[%s2] sm:$0x1]
      %476 = vset.pattern.permute.xlu0 0
      %477 = vperm.xlu0 %476, %v442
      %v478 = vpop.permute.xlu0 %477
      %481 = vset.pattern.permute.xlu0 0
      %482 = vperm.xlu0 %481, %v443
      %v483 = vpop.permute.xlu0 %482
      %486 = vset.pattern.permute.xlu0 0
      %487 = vperm.xlu0 %486, %v444
      %v488 = vpop.permute.xlu0 %487
      %491 = vset.pattern.permute.xlu0 0
      %492 = vperm.xlu0 %491, %v445
      %v493 = vpop.permute.xlu0 %492
      %496 = vset.pattern.permute.xlu0 0
      %497 = vperm.xlu0 %496, %v446
      %v498 = vpop.permute.xlu0 %497
      %501 = vset.pattern.permute.xlu0 0
      %502 = vperm.xlu0 %501, %v447
      %v503 = vpop.permute.xlu0 %502
      %506 = vset.pattern.permute.xlu0 0
      %507 = vperm.xlu0 %506, %v448
      %v508 = vpop.permute.xlu0 %507
      %511 = vset.pattern.permute.xlu0 0
      %512 = vperm.xlu0 %511, %v449
      %v513 = vpop.permute.xlu0 %512
      %516 = vset.pattern.permute.xlu0 0
      %517 = vperm.xlu0 %516, %v450
      %v518 = vpop.permute.xlu0 %517
      %521 = vset.pattern.permute.xlu0 0
      %522 = vperm.xlu0 %521, %v451
      %v523 = vpop.permute.xlu0 %522
      %526 = vset.pattern.permute.xlu0 0
      %527 = vperm.xlu0 %526, %v452
      %v528 = vpop.permute.xlu0 %527
      %531 = vset.pattern.permute.xlu0 0
      %532 = vperm.xlu0 %531, %v453
      %v533 = vpop.permute.xlu0 %532
      %536 = vset.pattern.permute.xlu0 0
      %537 = vperm.xlu0 %536, %v454
      %v538 = vpop.permute.xlu0 %537
      %541 = vset.pattern.permute.xlu0 0
      %542 = vperm.xlu0 %541, %v455
      %v543 = vpop.permute.xlu0 %542
      %546 = vset.pattern.permute.xlu0 0
      %547 = vperm.xlu0 %546, %v456
      %v548 = vpop.permute.xlu0 %547
      %551 = vset.pattern.permute.xlu0 0
      %552 = vperm.xlu0 %551, %v457
      %v553 = vpop.permute.xlu0 %552
      %v555 = vlaneseq
      %v556 = vshrl.u32 %v555, 7
      %v557 = vsub.s32 0, %v556
      %v558 = vrot.slane %v474, %v557
      %v559 = vmul.f32 %v478, %v558
      %v560 = vmul.f32 %v483, %v558
      %v561 = vmul.f32 %v488, %v558
      %v562 = vmul.f32 %v493, %v558
      %v563 = vmul.f32 %v498, %v558
      %v564 = vmul.f32 %v503, %v558
      %v565 = vmul.f32 %v508, %v558
      %v566 = vmul.f32 %v513, %v558
      %v567 = vmul.f32 %v518, %v558
      %v568 = vmul.f32 %v523, %v558
      %v569 = vmul.f32 %v528, %v558
      %v570 = vmul.f32 %v533, %v558
      %v571 = vmul.f32 %v538, %v558
      %v572 = vmul.f32 %v543, %v558
      %v573 = vmul.f32 %v548, %v558
      %v574 = vmul.f32 %v553, %v558
      %v575 = vld [vmem:[%s2 + $0x1] sm:$0x1]
      %576 = vset.pattern.permute.xlu0 1
      %577 = vperm.xlu0 %576, %v442
      %v578 = vpop.permute.xlu0 %577
      %580 = vset.pattern.permute.xlu0 1
      %581 = vperm.xlu0 %580, %v443
      %v582 = vpop.permute.xlu0 %581
      %584 = vset.pattern.permute.xlu0 1
      %585 = vperm.xlu0 %584, %v444
      %v586 = vpop.permute.xlu0 %585
      %588 = vset.pattern.permute.xlu0 1
      %589 = vperm.xlu0 %588, %v445
      %v590 = vpop.permute.xlu0 %589
      %592 = vset.pattern.permute.xlu0 1
      %593 = vperm.xlu0 %592, %v446
      %v594 = vpop.permute.xlu0 %593
      %596 = vset.pattern.permute.xlu0 1
      %597 = vperm.xlu0 %596, %v447
      %v598 = vpop.permute.xlu0 %597
      %600 = vset.pattern.permute.xlu0 1
      %601 = vperm.xlu0 %600, %v448
      %v602 = vpop.permute.xlu0 %601
      %604 = vset.pattern.permute.xlu0 1
      %605 = vperm.xlu0 %604, %v449
      %v606 = vpop.permute.xlu0 %605
      %608 = vset.pattern.permute.xlu0 1
      %609 = vperm.xlu0 %608, %v450
      %v610 = vpop.permute.xlu0 %609
      %612 = vset.pattern.permute.xlu0 1
      %613 = vperm.xlu0 %612, %v451
      %v614 = vpop.permute.xlu0 %613
      %616 = vset.pattern.permute.xlu0 1
      %617 = vperm.xlu0 %616, %v452
      %v618 = vpop.permute.xlu0 %617
      %620 = vset.pattern.permute.xlu0 1
      %621 = vperm.xlu0 %620, %v453
      %v622 = vpop.permute.xlu0 %621
      %624 = vset.pattern.permute.xlu0 1
      %625 = vperm.xlu0 %624, %v454
      %v626 = vpop.permute.xlu0 %625
      %628 = vset.pattern.permute.xlu0 1
      %629 = vperm.xlu0 %628, %v455
      %v630 = vpop.permute.xlu0 %629
      %632 = vset.pattern.permute.xlu0 1
      %633 = vperm.xlu0 %632, %v456
      %v634 = vpop.permute.xlu0 %633
      %636 = vset.pattern.permute.xlu0 1
      %637 = vperm.xlu0 %636, %v457
      %v638 = vpop.permute.xlu0 %637
      %v640 = vlaneseq
      %v641 = vshrl.u32 %v640, 7
      %v642 = vsub.s32 0, %v641
      %v643 = vrot.slane %v575, %v642
      %v644 = vmul.f32 %v578, %v643
      %v645 = vmul.f32 %v582, %v643
      %v646 = vmul.f32 %v586, %v643
      %v647 = vmul.f32 %v590, %v643
      %v648 = vmul.f32 %v594, %v643
      %v649 = vmul.f32 %v598, %v643
      %v650 = vmul.f32 %v602, %v643
      %v651 = vmul.f32 %v606, %v643
      %v652 = vmul.f32 %v610, %v643
      %v653 = vmul.f32 %v614, %v643
      %v654 = vmul.f32 %v618, %v643
      %v655 = vmul.f32 %v622, %v643
      %v656 = vmul.f32 %v626, %v643
      %v657 = vmul.f32 %v630, %v643
      %v658 = vmul.f32 %v634, %v643
      %v659 = vmul.f32 %v638, %v643
      %v660 = vadd.f32 %v559, %v644
      %v661 = vadd.f32 %v560, %v645
      %v662 = vadd.f32 %v561, %v646
      %v663 = vadd.f32 %v562, %v647
      %v664 = vadd.f32 %v563, %v648
      %v665 = vadd.f32 %v564, %v649
      %v666 = vadd.f32 %v565, %v650
      %v667 = vadd.f32 %v566, %v651
      %v668 = vadd.f32 %v567, %v652
      %v669 = vadd.f32 %v568, %v653
      %v670 = vadd.f32 %v569, %v654
      %v671 = vadd.f32 %v570, %v655
      %v672 = vadd.f32 %v571, %v656
      %v673 = vadd.f32 %v572, %v657
      %v674 = vadd.f32 %v573, %v658
      %v675 = vadd.f32 %v574, %v659
      %v676 = vld [vmem:[%s2 + $0x2] sm:$0x1]
      %678 = vset.pattern.permute.xlu0 0
      %679 = vperm.xlu0 %678, %v458
      %v680 = vpop.permute.xlu0 %679
      %683 = vset.pattern.permute.xlu0 0
      %684 = vperm.xlu0 %683, %v459
      %v685 = vpop.permute.xlu0 %684
      %688 = vset.pattern.permute.xlu0 0
      %689 = vperm.xlu0 %688, %v460
      %v690 = vpop.permute.xlu0 %689
      %693 = vset.pattern.permute.xlu0 0
      %694 = vperm.xlu0 %693, %v461
      %v695 = vpop.permute.xlu0 %694
      %698 = vset.pattern.permute.xlu0 0
      %699 = vperm.xlu0 %698, %v462
      %v700 = vpop.permute.xlu0 %699
      %703 = vset.pattern.permute.xlu0 0
      %704 = vperm.xlu0 %703, %v463
      %v705 = vpop.permute.xlu0 %704
      %708 = vset.pattern.permute.xlu0 0
      %709 = vperm.xlu0 %708, %v464
      %v710 = vpop.permute.xlu0 %709
      %713 = vset.pattern.permute.xlu0 0
      %714 = vperm.xlu0 %713, %v465
      %v715 = vpop.permute.xlu0 %714
      %718 = vset.pattern.permute.xlu0 0
      %719 = vperm.xlu0 %718, %v466
      %v720 = vpop.permute.xlu0 %719
      %723 = vset.pattern.permute.xlu0 0
      %724 = vperm.xlu0 %723, %v467
      %v725 = vpop.permute.xlu0 %724
      %728 = vset.pattern.permute.xlu0 0
      %729 = vperm.xlu0 %728, %v468
      %v730 = vpop.permute.xlu0 %729
      %733 = vset.pattern.permute.xlu0 0
      %734 = vperm.xlu0 %733, %v469
      %v735 = vpop.permute.xlu0 %734
      %738 = vset.pattern.permute.xlu0 0
      %739 = vperm.xlu0 %738, %v470
      %v740 = vpop.permute.xlu0 %739
      %743 = vset.pattern.permute.xlu0 0
      %744 = vperm.xlu0 %743, %v471
      %v745 = vpop.permute.xlu0 %744
      %748 = vset.pattern.permute.xlu0 0
      %749 = vperm.xlu0 %748, %v472
      %v750 = vpop.permute.xlu0 %749
      %753 = vset.pattern.permute.xlu0 0
      %754 = vperm.xlu0 %753, %v473
      %v755 = vpop.permute.xlu0 %754
      %v757 = vlaneseq
      %v758 = vshrl.u32 %v757, 7
      %v759 = vsub.s32 0, %v758
      %v760 = vrot.slane %v676, %v759
      %v761 = vmul.f32 %v680, %v760
      %v762 = vmul.f32 %v685, %v760
      %v763 = vmul.f32 %v690, %v760
      %v764 = vmul.f32 %v695, %v760
      %v765 = vmul.f32 %v700, %v760
      %v766 = vmul.f32 %v705, %v760
      %v767 = vmul.f32 %v710, %v760
      %v768 = vmul.f32 %v715, %v760
      %v769 = vmul.f32 %v720, %v760
      %v770 = vmul.f32 %v725, %v760
      %v771 = vmul.f32 %v730, %v760
      %v772 = vmul.f32 %v735, %v760
      %v773 = vmul.f32 %v740, %v760
      %v774 = vmul.f32 %v745, %v760
      %v775 = vmul.f32 %v750, %v760
      %v776 = vmul.f32 %v755, %v760
      %v777 = vadd.f32 %v660, %v761
      %v778 = vadd.f32 %v661, %v762
      %v779 = vadd.f32 %v662, %v763
      %v780 = vadd.f32 %v663, %v764
      %v781 = vadd.f32 %v664, %v765
      %v782 = vadd.f32 %v665, %v766
      %v783 = vadd.f32 %v666, %v767
      %v784 = vadd.f32 %v667, %v768
      %v785 = vadd.f32 %v668, %v769
      %v786 = vadd.f32 %v669, %v770
      %v787 = vadd.f32 %v670, %v771
      %v788 = vadd.f32 %v671, %v772
      %v789 = vadd.f32 %v672, %v773
      %v790 = vadd.f32 %v673, %v774
      %v791 = vadd.f32 %v674, %v775
      %v792 = vadd.f32 %v675, %v776
      %v793 = vld [vmem:[%s3] sm:$0x1]
      %v795 = vlaneseq
      %v796 = vshrl.u32 %v795, 7
      %v797 = vsub.s32 0, %v796
      %v798 = vrot.slane %v793, %v797
      %v800 = vadd.f32 %v777, %v798
      %v801 = vadd.f32 %v778, %v798
      %v802 = vadd.f32 %v779, %v798
      %v803 = vadd.f32 %v780, %v798
      %v804 = vadd.f32 %v781, %v798
      %v805 = vadd.f32 %v782, %v798
      %v806 = vadd.f32 %v783, %v798
      %v807 = vadd.f32 %v784, %v798
      %v808 = vadd.f32 %v785, %v798
      %v809 = vadd.f32 %v786, %v798
      %v810 = vadd.f32 %v787, %v798
      %v811 = vadd.f32 %v788, %v798
      %v812 = vadd.f32 %v789, %v798
      %v813 = vadd.f32 %v790, %v798
      %v814 = vadd.f32 %v791, %v798
      %v815 = vadd.f32 %v792, %v798
      %v816 = vpack.c.bf16 %v801, %v800
      %v817 = vpack.c.bf16 %v803, %v802
      %v818 = vpack.c.bf16 %v805, %v804
      %v819 = vpack.c.bf16 %v807, %v806
      %v820 = vpack.c.bf16 %v809, %v808
      %v821 = vpack.c.bf16 %v811, %v810
      %v822 = vpack.c.bf16 %v813, %v812
      %v823 = vpack.c.bf16 %v815, %v814
      %v824 = vmul.bf16 %v816, 1056980736
      %v825 = vmul.bf16 %v817, 1056980736
      %v826 = vmul.bf16 %v818, 1056980736
      %v827 = vmul.bf16 %v819, 1056980736
      %v828 = vmul.bf16 %v820, 1056980736
      %v829 = vmul.bf16 %v821, 1056980736
      %v830 = vmul.bf16 %v822, 1056980736
      %v831 = vmul.bf16 %v823, 1056980736
      %v832 = vtanh.bf16.pop %v824
      %v833 = vtanh.bf16.pop %v825
      %v834 = vtanh.bf16.pop %v826
      %v835 = vtanh.bf16.pop %v827
      %v836 = vtanh.bf16.pop %v828
      %v837 = vtanh.bf16.pop %v829
      %v838 = vtanh.bf16.pop %v830
      %v839 = vtanh.bf16.pop %v831
      %v840 = vadd.bf16 %v832, 1065369472
      %v841 = vadd.bf16 %v833, 1065369472
      %v842 = vadd.bf16 %v834, 1065369472
      %v843 = vadd.bf16 %v835, 1065369472
      %v844 = vadd.bf16 %v836, 1065369472
      %v845 = vadd.bf16 %v837, 1065369472
      %v846 = vadd.bf16 %v838, 1065369472
      %v847 = vadd.bf16 %v839, 1065369472
      %v848 = vmul.bf16 %v840, 1056980736
      %v849 = vmul.bf16 %v841, 1056980736
      %v850 = vmul.bf16 %v842, 1056980736
      %v851 = vmul.bf16 %v843, 1056980736
      %v852 = vmul.bf16 %v844, 1056980736
      %v853 = vmul.bf16 %v845, 1056980736
      %v854 = vmul.bf16 %v846, 1056980736
      %v855 = vmul.bf16 %v847, 1056980736
      %v856 = vmul.bf16 %v816, %v848
      %v857 = vmul.bf16 %v817, %v849
      %v858 = vmul.bf16 %v818, %v850
      %v859 = vmul.bf16 %v819, %v851
      %v860 = vmul.bf16 %v820, %v852
      %v861 = vmul.bf16 %v821, %v853
      %v862 = vmul.bf16 %v822, %v854
      %v863 = vmul.bf16 %v823, %v855
      %v864 = vld [vmem:[%s4] sm:$0xf]
      %v865 = vld [vmem:[%s4 + $0x4] sm:$0xf]
      %v866 = vld [vmem:[%s4 + $0x8] sm:$0xf]
      %v867 = vld [vmem:[%s4 + $0xc] sm:$0xf]
      %v868 = vld [vmem:[%s4 + $0x10] sm:$0xf]
      %v869 = vld [vmem:[%s4 + $0x14] sm:$0xf]
      %v870 = vld [vmem:[%s4 + $0x18] sm:$0xf]
      %v871 = vld [vmem:[%s4 + $0x1c] sm:$0xf]
      %v872 = vld [vmem:[%s4 + $0x20] sm:$0xf]
      %v873 = vld [vmem:[%s4 + $0x24] sm:$0xf]
      %v874 = vld [vmem:[%s4 + $0x28] sm:$0xf]
      %v875 = vld [vmem:[%s4 + $0x2c] sm:$0xf]
      %v876 = vld [vmem:[%s4 + $0x30] sm:$0xf]
      %v877 = vld [vmem:[%s4 + $0x34] sm:$0xf]
      %v878 = vld [vmem:[%s4 + $0x38] sm:$0xf]
      %v879 = vld [vmem:[%s4 + $0x3c] sm:$0xf]
      %v896 = vunpack.c.l.b16 %v864
      %v897 = vunpack.c.l.b16 %v865
      %v898 = vunpack.c.l.b16 %v866
      %v899 = vunpack.c.l.b16 %v867
      %v900 = vunpack.c.l.b16 %v868
      %v901 = vunpack.c.l.b16 %v869
      %v902 = vunpack.c.l.b16 %v870
      %v903 = vunpack.c.l.b16 %v871
      %v904 = vunpack.c.l.b16 %v872
      %v905 = vunpack.c.l.b16 %v873
      %v906 = vunpack.c.l.b16 %v874
      %v907 = vunpack.c.l.b16 %v875
      %v908 = vunpack.c.l.b16 %v876
      %v909 = vunpack.c.l.b16 %v877
      %v910 = vunpack.c.l.b16 %v878
      %v911 = vunpack.c.l.b16 %v879
      %v912 = vpack.c.b16 %v897, %v896
      %v913 = vpack.c.b16 %v899, %v898
      %v914 = vpack.c.b16 %v901, %v900
      %v915 = vpack.c.b16 %v903, %v902
      %v916 = vpack.c.b16 %v905, %v904
      %v917 = vpack.c.b16 %v907, %v906
      %v918 = vpack.c.b16 %v909, %v908
      %v919 = vpack.c.b16 %v911, %v910
      %928 = vmatprep.subr.bf16.mxu0 0
      %929 = vmatpush1.bf16.msra.mxu0 %v912
      %930 = vmatprep.subr.bf16.mxu0 0
      %931 = vmatpush1.bf16.msra.mxu0 %v913
      %932 = vmatprep.subr.bf16.mxu0 0
      %933 = vmatpush1.bf16.msra.mxu0 %v914
      %934 = vmatprep.subr.bf16.mxu0 0
      %935 = vmatpush1.bf16.msra.mxu0 %v915
      %936 = vmatprep.subr.bf16.mxu0 0
      %937 = vmatpush1.bf16.msra.mxu0 %v916
      %938 = vmatprep.subr.bf16.mxu0 0
      %939 = vmatpush1.bf16.msra.mxu0 %v917
      %940 = vmatprep.subr.bf16.mxu0 0
      %941 = vmatpush1.bf16.msra.mxu0 %v918
      %942 = vmatprep.subr.bf16.mxu0 0
      %943 = vmatpush1.bf16.msra.mxu0 %v919
      %944 = vmatprep.subr.bf16.mxu0 0
      %945 = vmatpush1.bf16.msra.mxu0 0
      %946 = vmatprep.subr.bf16.mxu0 0
      %947 = vmatpush1.bf16.msra.mxu0 0
      %948 = vmatprep.subr.bf16.mxu0 0
      %949 = vmatpush1.bf16.msra.mxu0 0
      %950 = vmatprep.subr.bf16.mxu0 0
      %951 = vmatpush1.bf16.msra.mxu0 0
      %952 = vmatprep.subr.bf16.mxu0 0
      %953 = vmatpush1.bf16.msra.mxu0 0
      %954 = vmatprep.subr.bf16.mxu0 0
      %955 = vmatpush1.bf16.msra.mxu0 0
      %956 = vmatprep.subr.bf16.mxu0 0
      %957 = vmatpush1.bf16.msra.mxu0 0
      %958 = vmatprep.subr.bf16.mxu0 0
      %959 = vmatpush1.bf16.msra.mxu0 0
      %960 = vmatprep.mubr.bf16.mxu0 0
      %961 = vmatmul.mubr.bf16.gmra.mrb[0].mxu0 %v856
      %v962 = vpop.f32.mrb[0].mxu0
      %v963 = vadd.f32 0.0, %v962
      %v964 = vpop.f32.mrb[0].mxu0
      %v965 = vpop.f32.mrb[0].mxu0
      %v966 = vadd.f32 0.0, %v965
      %v967 = vpop.f32.mrb[0].mxu0
      %968 = vmatprep.mubr.bf16.mxu0 0
      %969 = vmatmul.mubr.bf16.gmra.mrb[0].mxu0 %v857
      %v970 = vpop.f32.mrb[0].mxu0
      %v971 = vadd.f32 0.0, %v970
      %v972 = vpop.f32.mrb[0].mxu0
      %v973 = vpop.f32.mrb[0].mxu0
      %v974 = vadd.f32 0.0, %v973
      %v975 = vpop.f32.mrb[0].mxu0
      %976 = vmatprep.mubr.bf16.mxu0 0
      %977 = vmatmul.mubr.bf16.gmra.mrb[0].mxu0 %v858
      %v978 = vpop.f32.mrb[0].mxu0
      %v979 = vadd.f32 0.0, %v978
      %v980 = vpop.f32.mrb[0].mxu0
      %v981 = vpop.f32.mrb[0].mxu0
      %v982 = vadd.f32 0.0, %v981
      %v983 = vpop.f32.mrb[0].mxu0
      %984 = vmatprep.mubr.bf16.mxu0 0
      %985 = vmatmul.mubr.bf16.gmra.mrb[0].mxu0 %v859
      %v986 = vpop.f32.mrb[0].mxu0
      %v987 = vadd.f32 0.0, %v986
      %v988 = vpop.f32.mrb[0].mxu0
      %v989 = vpop.f32.mrb[0].mxu0
      %v990 = vadd.f32 0.0, %v989
      %v991 = vpop.f32.mrb[0].mxu0
      %992 = vmatprep.mubr.bf16.mxu0 0
      %993 = vmatmul.mubr.bf16.gmra.mrb[0].mxu0 %v860
      %v994 = vpop.f32.mrb[0].mxu0
      %v995 = vadd.f32 0.0, %v994
      %v996 = vpop.f32.mrb[0].mxu0
      %v997 = vpop.f32.mrb[0].mxu0
      %v998 = vadd.f32 0.0, %v997
      %v999 = vpop.f32.mrb[0].mxu0
      %1000 = vmatprep.mubr.bf16.mxu0 0
      %1001 = vmatmul.mubr.bf16.gmra.mrb[0].mxu0 %v861
      %v1002 = vpop.f32.mrb[0].mxu0
      %v1003 = vadd.f32 0.0, %v1002
      %v1004 = vpop.f32.mrb[0].mxu0
      %v1005 = vpop.f32.mrb[0].mxu0
      %v1006 = vadd.f32 0.0, %v1005
      %v1007 = vpop.f32.mrb[0].mxu0
      %1008 = vmatprep.mubr.bf16.mxu0 0
      %1009 = vmatmul.mubr.bf16.gmra.mrb[0].mxu0 %v862
      %v1010 = vpop.f32.mrb[0].mxu0
      %v1011 = vadd.f32 0.0, %v1010
      %v1012 = vpop.f32.mrb[0].mxu0
      %v1013 = vpop.f32.mrb[0].mxu0
      %v1014 = vadd.f32 0.0, %v1013
      %v1015 = vpop.f32.mrb[0].mxu0
      %1016 = vmatprep.mubr.bf16.mxu0 0
      %1017 = vmatmul.mubr.bf16.gmra.mrb[0].mxu0 %v863
      %v1018 = vpop.f32.mrb[0].mxu0
      %v1019 = vadd.f32 0.0, %v1018
      %v1020 = vpop.f32.mrb[0].mxu0
      %v1021 = vpop.f32.mrb[0].mxu0
      %v1022 = vadd.f32 0.0, %v1021
      %v1023 = vpop.f32.mrb[0].mxu0
      %1024 = vdwg.mxu0
      %v1025 = vpack.c.bf16 %v966, %v963
      %v1026 = vpack.c.bf16 %v974, %v971
      %v1027 = vpack.c.bf16 %v982, %v979
      %v1028 = vpack.c.bf16 %v990, %v987
      %v1029 = vpack.c.bf16 %v998, %v995
      %v1030 = vpack.c.bf16 %v1006, %v1003
      %v1031 = vpack.c.bf16 %v1014, %v1011
      %v1032 = vpack.c.bf16 %v1022, %v1019
      %v1033 = vld [vmem:[%s5] sm:$0x1]
      %v1035 = vpack.i.b16 %v1033, %v1033
      %v1037 = vlaneseq
      %v1038 = vshrl.u32 %v1037, 7
      %v1039 = vsub.s32 0, %v1038
      %v1040 = vrot.slane %v1035, %v1039
      %v1041 = vadd.bf16 %v1025, %v1040
      %v1042 = vadd.bf16 %v1026, %v1040
      %v1043 = vadd.bf16 %v1027, %v1040
      %v1044 = vadd.bf16 %v1028, %v1040
      %v1045 = vadd.bf16 %v1029, %v1040
      %v1046 = vadd.bf16 %v1030, %v1040
      %v1047 = vadd.bf16 %v1031, %v1040
      %v1048 = vadd.bf16 %v1032, %v1040
      %v1049 = vmul.bf16 %v1041, 1056980736
      %v1050 = vmul.bf16 %v1042, 1056980736
      %v1051 = vmul.bf16 %v1043, 1056980736
      %v1052 = vmul.bf16 %v1044, 1056980736
      %v1053 = vmul.bf16 %v1045, 1056980736
      %v1054 = vmul.bf16 %v1046, 1056980736
      %v1055 = vmul.bf16 %v1047, 1056980736
      %v1056 = vmul.bf16 %v1048, 1056980736
      %v1057 = vtanh.bf16.pop %v1049
      %v1058 = vtanh.bf16.pop %v1050
      %v1059 = vtanh.bf16.pop %v1051
      %v1060 = vtanh.bf16.pop %v1052
      %v1061 = vtanh.bf16.pop %v1053
      %v1062 = vtanh.bf16.pop %v1054
      %v1063 = vtanh.bf16.pop %v1055
      %v1064 = vtanh.bf16.pop %v1056
      %v1065 = vadd.bf16 %v1057, 1065369472
      %v1066 = vadd.bf16 %v1058, 1065369472
      %v1067 = vadd.bf16 %v1059, 1065369472
      %v1068 = vadd.bf16 %v1060, 1065369472
      %v1069 = vadd.bf16 %v1061, 1065369472
      %v1070 = vadd.bf16 %v1062, 1065369472
      %v1071 = vadd.bf16 %v1063, 1065369472
      %v1072 = vadd.bf16 %v1064, 1065369472
      %v1073 = vmul.bf16 %v1065, 1056980736
      %v1074 = vmul.bf16 %v1066, 1056980736
      %v1075 = vmul.bf16 %v1067, 1056980736
      %v1076 = vmul.bf16 %v1068, 1056980736
      %v1077 = vmul.bf16 %v1069, 1056980736
      %v1078 = vmul.bf16 %v1070, 1056980736
      %v1079 = vmul.bf16 %v1071, 1056980736
      %v1080 = vmul.bf16 %v1072, 1056980736
      %v1081 = vmul.bf16 %v1041, %v1073
      %v1082 = vmul.bf16 %v1042, %v1074
      %v1083 = vmul.bf16 %v1043, %v1075
      %v1084 = vmul.bf16 %v1044, %v1076
      %v1085 = vmul.bf16 %v1045, %v1077
      %v1086 = vmul.bf16 %v1046, %v1078
      %v1087 = vmul.bf16 %v1047, %v1079
      %v1088 = vmul.bf16 %v1048, %v1080
      %v1089 = vld [vmem:[%s6] sm:$0xf]
      %v1090 = vld [vmem:[%s6 + $0x4] sm:$0xf]
      %v1091 = vld [vmem:[%s6 + $0x8] sm:$0xf]
      %v1092 = vld [vmem:[%s6 + $0xc] sm:$0xf]
      %v1093 = vld [vmem:[%s6 + $0x10] sm:$0xf]
      %v1094 = vld [vmem:[%s6 + $0x14] sm:$0xf]
      %v1095 = vld [vmem:[%s6 + $0x18] sm:$0xf]
      %v1096 = vld [vmem:[%s6 + $0x1c] sm:$0xf]
      %v1097 = vld [vmem:[%s6 + $0x20] sm:$0xf]
      %v1098 = vld [vmem:[%s6 + $0x24] sm:$0xf]
      %v1099 = vld [vmem:[%s6 + $0x28] sm:$0xf]
      %v1100 = vld [vmem:[%s6 + $0x2c] sm:$0xf]
      %v1101 = vld [vmem:[%s6 + $0x30] sm:$0xf]
      %v1102 = vld [vmem:[%s6 + $0x34] sm:$0xf]
      %v1103 = vld [vmem:[%s6 + $0x38] sm:$0xf]
      %v1104 = vld [vmem:[%s6 + $0x3c] sm:$0xf]
      %v1121 = vunpack.c.l.b16 %v1089
      %v1122 = vunpack.c.l.b16 %v1090
      %v1123 = vunpack.c.l.b16 %v1091
      %v1124 = vunpack.c.l.b16 %v1092
      %v1125 = vunpack.c.l.b16 %v1093
      %v1126 = vunpack.c.l.b16 %v1094
      %v1127 = vunpack.c.l.b16 %v1095
      %v1128 = vunpack.c.l.b16 %v1096
      %v1129 = vunpack.c.l.b16 %v1097
      %v1130 = vunpack.c.l.b16 %v1098
      %v1131 = vunpack.c.l.b16 %v1099
      %v1132 = vunpack.c.l.b16 %v1100
      %v1133 = vunpack.c.l.b16 %v1101
      %v1134 = vunpack.c.l.b16 %v1102
      %v1135 = vunpack.c.l.b16 %v1103
      %v1136 = vunpack.c.l.b16 %v1104
      %v1137 = vpack.c.b16 %v1122, %v1121
      %v1138 = vpack.c.b16 %v1124, %v1123
      %v1139 = vpack.c.b16 %v1126, %v1125
      %v1140 = vpack.c.b16 %v1128, %v1127
      %v1141 = vpack.c.b16 %v1130, %v1129
      %v1142 = vpack.c.b16 %v1132, %v1131
      %v1143 = vpack.c.b16 %v1134, %v1133
      %v1144 = vpack.c.b16 %v1136, %v1135
      %1153 = vmatprep.subr.bf16.mxu0 0
      %1154 = vmatpush1.bf16.msra.mxu0 %v1137
      %1155 = vmatprep.subr.bf16.mxu0 0
      %1156 = vmatpush1.bf16.msra.mxu0 %v1138
      %1157 = vmatprep.subr.bf16.mxu0 0
      %1158 = vmatpush1.bf16.msra.mxu0 %v1139
      %1159 = vmatprep.subr.bf16.mxu0 0
      %1160 = vmatpush1.bf16.msra.mxu0 %v1140
      %1161 = vmatprep.subr.bf16.mxu0 0
      %1162 = vmatpush1.bf16.msra.mxu0 %v1141
      %1163 = vmatprep.subr.bf16.mxu0 0
      %1164 = vmatpush1.bf16.msra.mxu0 %v1142
      %1165 = vmatprep.subr.bf16.mxu0 0
      %1166 = vmatpush1.bf16.msra.mxu0 %v1143
      %1167 = vmatprep.subr.bf16.mxu0 0
      %1168 = vmatpush1.bf16.msra.mxu0 %v1144
      %1169 = vmatprep.subr.bf16.mxu0 0
      %1170 = vmatpush1.bf16.msra.mxu0 0
      %1171 = vmatprep.subr.bf16.mxu0 0
      %1172 = vmatpush1.bf16.msra.mxu0 0
      %1173 = vmatprep.subr.bf16.mxu0 0
      %1174 = vmatpush1.bf16.msra.mxu0 0
      %1175 = vmatprep.subr.bf16.mxu0 0
      %1176 = vmatpush1.bf16.msra.mxu0 0
      %1177 = vmatprep.subr.bf16.mxu0 0
      %1178 = vmatpush1.bf16.msra.mxu0 0
      %1179 = vmatprep.subr.bf16.mxu0 0
      %1180 = vmatpush1.bf16.msra.mxu0 0
      %1181 = vmatprep.subr.bf16.mxu0 0
      %1182 = vmatpush1.bf16.msra.mxu0 0
      %1183 = vmatprep.subr.bf16.mxu0 0
      %1184 = vmatpush1.bf16.msra.mxu0 0
      %1185 = vmatprep.mubr.bf16.mxu0 0
      %1186 = vmatmul.mubr.bf16.gmra.mrb[0].mxu0 %v1081
      %v1187 = vpop.f32.mrb[0].mxu0
      %v1188 = vadd.f32 0.0, %v1187
      %v1189 = vpop.f32.mrb[0].mxu0
      %v1190 = vpop.f32.mrb[0].mxu0
      %v1191 = vadd.f32 0.0, %v1190
      %v1192 = vpop.f32.mrb[0].mxu0
      %1193 = vmatprep.mubr.bf16.mxu0 0
      %1194 = vmatmul.mubr.bf16.gmra.mrb[0].mxu0 %v1082
      %v1195 = vpop.f32.mrb[0].mxu0
      %v1196 = vadd.f32 0.0, %v1195
      %v1197 = vpop.f32.mrb[0].mxu0
      %v1198 = vpop.f32.mrb[0].mxu0
      %v1199 = vadd.f32 0.0, %v1198
      %v1200 = vpop.f32.mrb[0].mxu0
      %1201 = vmatprep.mubr.bf16.mxu0 0
      %1202 = vmatmul.mubr.bf16.gmra.mrb[0].mxu0 %v1083
      %v1203 = vpop.f32.mrb[0].mxu0
      %v1204 = vadd.f32 0.0, %v1203
      %v1205 = vpop.f32.mrb[0].mxu0
      %v1206 = vpop.f32.mrb[0].mxu0
      %v1207 = vadd.f32 0.0, %v1206
      %v1208 = vpop.f32.mrb[0].mxu0
      %1209 = vmatprep.mubr.bf16.mxu0 0
      %1210 = vmatmul.mubr.bf16.gmra.mrb[0].mxu0 %v1084
      %v1211 = vpop.f32.mrb[0].mxu0
      %v1212 = vadd.f32 0.0, %v1211
      %v1213 = vpop.f32.mrb[0].mxu0
      %v1214 = vpop.f32.mrb[0].mxu0
      %v1215 = vadd.f32 0.0, %v1214
      %v1216 = vpop.f32.mrb[0].mxu0
      %1217 = vmatprep.mubr.bf16.mxu0 0
      %1218 = vmatmul.mubr.bf16.gmra.mrb[0].mxu0 %v1085
      %v1219 = vpop.f32.mrb[0].mxu0
      %v1220 = vadd.f32 0.0, %v1219
      %v1221 = vpop.f32.mrb[0].mxu0
      %v1222 = vpop.f32.mrb[0].mxu0
      %v1223 = vadd.f32 0.0, %v1222
      %v1224 = vpop.f32.mrb[0].mxu0
      %1225 = vmatprep.mubr.bf16.mxu0 0
      %1226 = vmatmul.mubr.bf16.gmra.mrb[0].mxu0 %v1086
      %v1227 = vpop.f32.mrb[0].mxu0
      %v1228 = vadd.f32 0.0, %v1227
      %v1229 = vpop.f32.mrb[0].mxu0
      %v1230 = vpop.f32.mrb[0].mxu0
      %v1231 = vadd.f32 0.0, %v1230
      %v1232 = vpop.f32.mrb[0].mxu0
      %1233 = vmatprep.mubr.bf16.mxu0 0
      %1234 = vmatmul.mubr.bf16.gmra.mrb[0].mxu0 %v1087
      %v1235 = vpop.f32.mrb[0].mxu0
      %v1236 = vadd.f32 0.0, %v1235
      %v1237 = vpop.f32.mrb[0].mxu0
      %v1238 = vpop.f32.mrb[0].mxu0
      %v1239 = vadd.f32 0.0, %v1238
      %v1240 = vpop.f32.mrb[0].mxu0
      %1241 = vmatprep.mubr.bf16.mxu0 0
      %1242 = vmatmul.mubr.bf16.gmra.mrb[0].mxu0 %v1088
      %v1243 = vpop.f32.mrb[0].mxu0
      %v1244 = vadd.f32 0.0, %v1243
      %v1245 = vpop.f32.mrb[0].mxu0
      %v1246 = vpop.f32.mrb[0].mxu0
      %v1247 = vadd.f32 0.0, %v1246
      %v1248 = vpop.f32.mrb[0].mxu0
      %1249 = vdwg.mxu0
      %v1250 = vpack.c.bf16 %v1191, %v1188
      %v1251 = vpack.c.bf16 %v1199, %v1196
      %v1252 = vpack.c.bf16 %v1207, %v1204
      %v1253 = vpack.c.bf16 %v1215, %v1212
      %v1254 = vpack.c.bf16 %v1223, %v1220
      %v1255 = vpack.c.bf16 %v1231, %v1228
      %v1256 = vpack.c.bf16 %v1239, %v1236
      %v1257 = vpack.c.bf16 %v1247, %v1244
      %v1258 = vld [vmem:[%s7] sm:$0x1]
      %v1260 = vpack.i.b16 %v1258, %v1258
      %v1262 = vlaneseq
      %v1263 = vshrl.u32 %v1262, 7
      %v1264 = vsub.s32 0, %v1263
      %v1265 = vrot.slane %v1260, %v1264
      %v1266 = vadd.bf16 %v1250, %v1265
      %v1267 = vadd.bf16 %v1251, %v1265
      %v1268 = vadd.bf16 %v1252, %v1265
      %v1269 = vadd.bf16 %v1253, %v1265
      %v1270 = vadd.bf16 %v1254, %v1265
      %v1271 = vadd.bf16 %v1255, %v1265
      %v1272 = vadd.bf16 %v1256, %v1265
      %v1273 = vadd.bf16 %v1257, %v1265
      %v1274 = vmul.bf16 %v1266, 1056980736
      %v1275 = vmul.bf16 %v1267, 1056980736
      %v1276 = vmul.bf16 %v1268, 1056980736
      %v1277 = vmul.bf16 %v1269, 1056980736
      %v1278 = vmul.bf16 %v1270, 1056980736
      %v1279 = vmul.bf16 %v1271, 1056980736
      %v1280 = vmul.bf16 %v1272, 1056980736
      %v1281 = vmul.bf16 %v1273, 1056980736
      %v1282 = vtanh.bf16.pop %v1274
      %v1283 = vtanh.bf16.pop %v1275
      %v1284 = vtanh.bf16.pop %v1276
      %v1285 = vtanh.bf16.pop %v1277
      %v1286 = vtanh.bf16.pop %v1278
      %v1287 = vtanh.bf16.pop %v1279
      %v1288 = vtanh.bf16.pop %v1280
      %v1289 = vtanh.bf16.pop %v1281
      %v1290 = vadd.bf16 %v1282, 1065369472
      %v1291 = vadd.bf16 %v1283, 1065369472
      %v1292 = vadd.bf16 %v1284, 1065369472
      %v1293 = vadd.bf16 %v1285, 1065369472
      %v1294 = vadd.bf16 %v1286, 1065369472
      %v1295 = vadd.bf16 %v1287, 1065369472
      %v1296 = vadd.bf16 %v1288, 1065369472
      %v1297 = vadd.bf16 %v1289, 1065369472
      %v1298 = vmul.bf16 %v1290, 1056980736
      %v1299 = vmul.bf16 %v1291, 1056980736
      %v1300 = vmul.bf16 %v1292, 1056980736
      %v1301 = vmul.bf16 %v1293, 1056980736
      %v1302 = vmul.bf16 %v1294, 1056980736
      %v1303 = vmul.bf16 %v1295, 1056980736
      %v1304 = vmul.bf16 %v1296, 1056980736
      %v1305 = vmul.bf16 %v1297, 1056980736
      %v1306 = vmul.bf16 %v1266, %v1298
      %v1307 = vmul.bf16 %v1267, %v1299
      %v1308 = vmul.bf16 %v1268, %v1300
      %v1309 = vmul.bf16 %v1269, %v1301
      %v1310 = vmul.bf16 %v1270, %v1302
      %v1311 = vmul.bf16 %v1271, %v1303
      %v1312 = vmul.bf16 %v1272, %v1304
      %v1313 = vmul.bf16 %v1273, %v1305
      %v1314 = vld [vmem:[%s8] sm:$0xf]
      %v1315 = vld [vmem:[%s8 + $0x4] sm:$0xf]
      %v1316 = vld [vmem:[%s8 + $0x8] sm:$0xf]
      %v1317 = vld [vmem:[%s8 + $0xc] sm:$0xf]
      %v1318 = vld [vmem:[%s8 + $0x10] sm:$0xf]
      %v1319 = vld [vmem:[%s8 + $0x14] sm:$0xf]
      %v1320 = vld [vmem:[%s8 + $0x18] sm:$0xf]
      %v1321 = vld [vmem:[%s8 + $0x1c] sm:$0xf]
      %v1322 = vld [vmem:[%s8 + $0x20] sm:$0xf]
      %v1323 = vld [vmem:[%s8 + $0x24] sm:$0xf]
      %v1324 = vld [vmem:[%s8 + $0x28] sm:$0xf]
      %v1325 = vld [vmem:[%s8 + $0x2c] sm:$0xf]
      %v1326 = vld [vmem:[%s8 + $0x30] sm:$0xf]
      %v1327 = vld [vmem:[%s8 + $0x34] sm:$0xf]
      %v1328 = vld [vmem:[%s8 + $0x38] sm:$0xf]
      %v1329 = vld [vmem:[%s8 + $0x3c] sm:$0xf]
      %v1346 = vunpack.c.l.b16 %v1314
      %v1347 = vunpack.c.l.b16 %v1315
      %v1348 = vunpack.c.l.b16 %v1316
      %v1349 = vunpack.c.l.b16 %v1317
      %v1350 = vunpack.c.l.b16 %v1318
      %v1351 = vunpack.c.l.b16 %v1319
      %v1352 = vunpack.c.l.b16 %v1320
      %v1353 = vunpack.c.l.b16 %v1321
      %v1354 = vunpack.c.l.b16 %v1322
      %v1355 = vunpack.c.l.b16 %v1323
      %v1356 = vunpack.c.l.b16 %v1324
      %v1357 = vunpack.c.l.b16 %v1325
      %v1358 = vunpack.c.l.b16 %v1326
      %v1359 = vunpack.c.l.b16 %v1327
      %v1360 = vunpack.c.l.b16 %v1328
      %v1361 = vunpack.c.l.b16 %v1329
      %v1362 = vpack.c.b16 %v1347, %v1346
      %v1363 = vpack.c.b16 %v1349, %v1348
      %v1364 = vpack.c.b16 %v1351, %v1350
      %v1365 = vpack.c.b16 %v1353, %v1352
      %v1366 = vpack.c.b16 %v1355, %v1354
      %v1367 = vpack.c.b16 %v1357, %v1356
      %v1368 = vpack.c.b16 %v1359, %v1358
      %v1369 = vpack.c.b16 %v1361, %v1360
      %1378 = vmatprep.subr.bf16.mxu0 0
      %1379 = vmatpush1.bf16.msra.mxu0 %v1362
      %1380 = vmatprep.subr.bf16.mxu0 0
      %1381 = vmatpush1.bf16.msra.mxu0 %v1363
      %1382 = vmatprep.subr.bf16.mxu0 0
      %1383 = vmatpush1.bf16.msra.mxu0 %v1364
      %1384 = vmatprep.subr.bf16.mxu0 0
      %1385 = vmatpush1.bf16.msra.mxu0 %v1365
      %1386 = vmatprep.subr.bf16.mxu0 0
      %1387 = vmatpush1.bf16.msra.mxu0 %v1366
      %1388 = vmatprep.subr.bf16.mxu0 0
      %1389 = vmatpush1.bf16.msra.mxu0 %v1367
      %1390 = vmatprep.subr.bf16.mxu0 0
      %1391 = vmatpush1.bf16.msra.mxu0 %v1368
      %1392 = vmatprep.subr.bf16.mxu0 0
      %1393 = vmatpush1.bf16.msra.mxu0 %v1369
      %1394 = vmatprep.subr.bf16.mxu0 0
      %1395 = vmatpush1.bf16.msra.mxu0 0
      %1396 = vmatprep.subr.bf16.mxu0 0
      %1397 = vmatpush1.bf16.msra.mxu0 0
      %1398 = vmatprep.subr.bf16.mxu0 0
      %1399 = vmatpush1.bf16.msra.mxu0 0
      %1400 = vmatprep.subr.bf16.mxu0 0
      %1401 = vmatpush1.bf16.msra.mxu0 0
      %1402 = vmatprep.subr.bf16.mxu0 0
      %1403 = vmatpush1.bf16.msra.mxu0 0
      %1404 = vmatprep.subr.bf16.mxu0 0
      %1405 = vmatpush1.bf16.msra.mxu0 0
      %1406 = vmatprep.subr.bf16.mxu0 0
      %1407 = vmatpush1.bf16.msra.mxu0 0
      %1408 = vmatprep.subr.bf16.mxu0 0
      %1409 = vmatpush1.bf16.msra.mxu0 0
      %1410 = vmatprep.mubr.bf16.mxu0 0
      %1411 = vmatmul.mubr.bf16.gmra.mrb[0].mxu0 %v1306
      %v1412 = vpop.f32.mrb[0].mxu0
      %v1413 = vadd.f32 0.0, %v1412
      %v1414 = vpop.f32.mrb[0].mxu0
      %v1415 = vpop.f32.mrb[0].mxu0
      %v1416 = vadd.f32 0.0, %v1415
      %v1417 = vpop.f32.mrb[0].mxu0
      %1418 = vmatprep.mubr.bf16.mxu0 0
      %1419 = vmatmul.mubr.bf16.gmra.mrb[0].mxu0 %v1307
      %v1420 = vpop.f32.mrb[0].mxu0
      %v1421 = vadd.f32 0.0, %v1420
      %v1422 = vpop.f32.mrb[0].mxu0
      %v1423 = vpop.f32.mrb[0].mxu0
      %v1424 = vadd.f32 0.0, %v1423
      %v1425 = vpop.f32.mrb[0].mxu0
      %1426 = vmatprep.mubr.bf16.mxu0 0
      %1427 = vmatmul.mubr.bf16.gmra.mrb[0].mxu0 %v1308
      %v1428 = vpop.f32.mrb[0].mxu0
      %v1429 = vadd.f32 0.0, %v1428
      %v1430 = vpop.f32.mrb[0].mxu0
      %v1431 = vpop.f32.mrb[0].mxu0
      %v1432 = vadd.f32 0.0, %v1431
      %v1433 = vpop.f32.mrb[0].mxu0
      %1434 = vmatprep.mubr.bf16.mxu0 0
      %1435 = vmatmul.mubr.bf16.gmra.mrb[0].mxu0 %v1309
      %v1436 = vpop.f32.mrb[0].mxu0
      %v1437 = vadd.f32 0.0, %v1436
      %v1438 = vpop.f32.mrb[0].mxu0
      %v1439 = vpop.f32.mrb[0].mxu0
      %v1440 = vadd.f32 0.0, %v1439
      %v1441 = vpop.f32.mrb[0].mxu0
      %1442 = vmatprep.mubr.bf16.mxu0 0
      %1443 = vmatmul.mubr.bf16.gmra.mrb[0].mxu0 %v1310
      %v1444 = vpop.f32.mrb[0].mxu0
      %v1445 = vadd.f32 0.0, %v1444
      %v1446 = vpop.f32.mrb[0].mxu0
      %v1447 = vpop.f32.mrb[0].mxu0
      %v1448 = vadd.f32 0.0, %v1447
      %v1449 = vpop.f32.mrb[0].mxu0
      %1450 = vmatprep.mubr.bf16.mxu0 0
      %1451 = vmatmul.mubr.bf16.gmra.mrb[0].mxu0 %v1311
      %v1452 = vpop.f32.mrb[0].mxu0
      %v1453 = vadd.f32 0.0, %v1452
      %v1454 = vpop.f32.mrb[0].mxu0
      %v1455 = vpop.f32.mrb[0].mxu0
      %v1456 = vadd.f32 0.0, %v1455
      %v1457 = vpop.f32.mrb[0].mxu0
      %1458 = vmatprep.mubr.bf16.mxu0 0
      %1459 = vmatmul.mubr.bf16.gmra.mrb[0].mxu0 %v1312
      %v1460 = vpop.f32.mrb[0].mxu0
      %v1461 = vadd.f32 0.0, %v1460
      %v1462 = vpop.f32.mrb[0].mxu0
      %v1463 = vpop.f32.mrb[0].mxu0
      %v1464 = vadd.f32 0.0, %v1463
      %v1465 = vpop.f32.mrb[0].mxu0
      %1466 = vmatprep.mubr.bf16.mxu0 0
      %1467 = vmatmul.mubr.bf16.gmra.mrb[0].mxu0 %v1313
      %v1468 = vpop.f32.mrb[0].mxu0
      %v1469 = vadd.f32 0.0, %v1468
      %v1470 = vpop.f32.mrb[0].mxu0
      %v1471 = vpop.f32.mrb[0].mxu0
      %v1472 = vadd.f32 0.0, %v1471
      %v1473 = vpop.f32.mrb[0].mxu0
      %1474 = vdwg.mxu0
      %v1475 = vpack.c.bf16 %v1416, %v1413
      %v1476 = vpack.c.bf16 %v1424, %v1421
      %v1477 = vpack.c.bf16 %v1432, %v1429
      %v1478 = vpack.c.bf16 %v1440, %v1437
      %v1479 = vpack.c.bf16 %v1448, %v1445
      %v1480 = vpack.c.bf16 %v1456, %v1453
      %v1481 = vpack.c.bf16 %v1464, %v1461
      %v1482 = vpack.c.bf16 %v1472, %v1469
      %v1483 = vld [vmem:[%s9] sm:$0x1]
      %v1485 = vpack.i.b16 %v1483, %v1483
      %v1487 = vlaneseq
      %v1488 = vshrl.u32 %v1487, 7
      %v1489 = vsub.s32 0, %v1488
      %v1490 = vrot.slane %v1485, %v1489
      %v1491 = vadd.bf16 %v1475, %v1490
      %v1492 = vadd.bf16 %v1476, %v1490
      %v1493 = vadd.bf16 %v1477, %v1490
      %v1494 = vadd.bf16 %v1478, %v1490
      %v1495 = vadd.bf16 %v1479, %v1490
      %v1496 = vadd.bf16 %v1480, %v1490
      %v1497 = vadd.bf16 %v1481, %v1490
      %v1498 = vadd.bf16 %v1482, %v1490
      %v1499 = vmul.bf16 %v1491, 1056980736
      %v1500 = vmul.bf16 %v1492, 1056980736
      %v1501 = vmul.bf16 %v1493, 1056980736
      %v1502 = vmul.bf16 %v1494, 1056980736
      %v1503 = vmul.bf16 %v1495, 1056980736
      %v1504 = vmul.bf16 %v1496, 1056980736
      %v1505 = vmul.bf16 %v1497, 1056980736
      %v1506 = vmul.bf16 %v1498, 1056980736
      %v1507 = vtanh.bf16.pop %v1499
      %v1508 = vtanh.bf16.pop %v1500
      %v1509 = vtanh.bf16.pop %v1501
      %v1510 = vtanh.bf16.pop %v1502
      %v1511 = vtanh.bf16.pop %v1503
      %v1512 = vtanh.bf16.pop %v1504
      %v1513 = vtanh.bf16.pop %v1505
      %v1514 = vtanh.bf16.pop %v1506
      %v1515 = vadd.bf16 %v1507, 1065369472
      %v1516 = vadd.bf16 %v1508, 1065369472
      %v1517 = vadd.bf16 %v1509, 1065369472
      %v1518 = vadd.bf16 %v1510, 1065369472
      %v1519 = vadd.bf16 %v1511, 1065369472
      %v1520 = vadd.bf16 %v1512, 1065369472
      %v1521 = vadd.bf16 %v1513, 1065369472
      %v1522 = vadd.bf16 %v1514, 1065369472
      %v1523 = vmul.bf16 %v1515, 1056980736
      %v1524 = vmul.bf16 %v1516, 1056980736
      %v1525 = vmul.bf16 %v1517, 1056980736
      %v1526 = vmul.bf16 %v1518, 1056980736
      %v1527 = vmul.bf16 %v1519, 1056980736
      %v1528 = vmul.bf16 %v1520, 1056980736
      %v1529 = vmul.bf16 %v1521, 1056980736
      %v1530 = vmul.bf16 %v1522, 1056980736
      %v1531 = vmul.bf16 %v1491, %v1523
      %v1532 = vmul.bf16 %v1492, %v1524
      %v1533 = vmul.bf16 %v1493, %v1525
      %v1534 = vmul.bf16 %v1494, %v1526
      %v1535 = vmul.bf16 %v1495, %v1527
      %v1536 = vmul.bf16 %v1496, %v1528
      %v1537 = vmul.bf16 %v1497, %v1529
      %v1538 = vmul.bf16 %v1498, %v1530
      %v1539 = vld [vmem:[%s10] sm:$0xf]
      %v1540 = vld [vmem:[%s10 + $0x4] sm:$0xf]
      %v1541 = vld [vmem:[%s10 + $0x8] sm:$0xf]
      %v1542 = vld [vmem:[%s10 + $0xc] sm:$0xf]
      %v1543 = vld [vmem:[%s10 + $0x10] sm:$0xf]
      %v1544 = vld [vmem:[%s10 + $0x14] sm:$0xf]
      %v1545 = vld [vmem:[%s10 + $0x18] sm:$0xf]
      %v1546 = vld [vmem:[%s10 + $0x1c] sm:$0xf]
      %v1547 = vld [vmem:[%s10 + $0x20] sm:$0xf]
      %v1548 = vld [vmem:[%s10 + $0x24] sm:$0xf]
      %v1549 = vld [vmem:[%s10 + $0x28] sm:$0xf]
      %v1550 = vld [vmem:[%s10 + $0x2c] sm:$0xf]
      %v1551 = vld [vmem:[%s10 + $0x30] sm:$0xf]
      %v1552 = vld [vmem:[%s10 + $0x34] sm:$0xf]
      %v1553 = vld [vmem:[%s10 + $0x38] sm:$0xf]
      %v1554 = vld [vmem:[%s10 + $0x3c] sm:$0xf]
      %v1555 = vld [vmem:[%s11] sm:$0x1]
      %v1557 = vlaneseq
      %v1558 = vshrl.u32 %v1557, 7
      %v1559 = vsub.s32 0, %v1558
      %v1560 = vrot.slane %v1555, %v1559
      %v1578 = vunpack.c.l.b16 %v1539
      %v1579 = vunpack.c.l.b16 %v1540
      %v1580 = vunpack.c.l.b16 %v1541
      %v1581 = vunpack.c.l.b16 %v1542
      %v1582 = vunpack.c.l.b16 %v1543
      %v1583 = vunpack.c.l.b16 %v1544
      %v1584 = vunpack.c.l.b16 %v1545
      %v1585 = vunpack.c.l.b16 %v1546
      %v1586 = vunpack.c.l.b16 %v1547
      %v1587 = vunpack.c.l.b16 %v1548
      %v1588 = vunpack.c.l.b16 %v1549
      %v1589 = vunpack.c.l.b16 %v1550
      %v1590 = vunpack.c.l.b16 %v1551
      %v1591 = vunpack.c.l.b16 %v1552
      %v1592 = vunpack.c.l.b16 %v1553
      %v1593 = vunpack.c.l.b16 %v1554
      %v1594 = vpack.c.b16 %v1579, %v1578
      %v1595 = vpack.c.b16 %v1581, %v1580
      %v1596 = vpack.c.b16 %v1583, %v1582
      %v1597 = vpack.c.b16 %v1585, %v1584
      %v1598 = vpack.c.b16 %v1587, %v1586
      %v1599 = vpack.c.b16 %v1589, %v1588
      %v1600 = vpack.c.b16 %v1591, %v1590
      %v1601 = vpack.c.b16 %v1593, %v1592
      %1610 = vmatprep.subr.bf16.mxu0 0
      %1611 = vmatpush1.bf16.msra.mxu0 %v1594
      %1612 = vmatprep.subr.bf16.mxu0 0
      %1613 = vmatpush1.bf16.msra.mxu0 %v1595
      %1614 = vmatprep.subr.bf16.mxu0 0
      %1615 = vmatpush1.bf16.msra.mxu0 %v1596
      %1616 = vmatprep.subr.bf16.mxu0 0
      %1617 = vmatpush1.bf16.msra.mxu0 %v1597
      %1618 = vmatprep.subr.bf16.mxu0 0
      %1619 = vmatpush1.bf16.msra.mxu0 %v1598
      %1620 = vmatprep.subr.bf16.mxu0 0
      %1621 = vmatpush1.bf16.msra.mxu0 %v1599
      %1622 = vmatprep.subr.bf16.mxu0 0
      %1623 = vmatpush1.bf16.msra.mxu0 %v1600
      %1624 = vmatprep.subr.bf16.mxu0 0
      %1625 = vmatpush1.bf16.msra.mxu0 %v1601
      %1626 = vmatprep.subr.bf16.mxu0 0
      %1627 = vmatpush1.bf16.msra.mxu0 0
      %1628 = vmatprep.subr.bf16.mxu0 0
      %1629 = vmatpush1.bf16.msra.mxu0 0
      %1630 = vmatprep.subr.bf16.mxu0 0
      %1631 = vmatpush1.bf16.msra.mxu0 0
      %1632 = vmatprep.subr.bf16.mxu0 0
      %1633 = vmatpush1.bf16.msra.mxu0 0
      %1634 = vmatprep.subr.bf16.mxu0 0
      %1635 = vmatpush1.bf16.msra.mxu0 0
      %1636 = vmatprep.subr.bf16.mxu0 0
      %1637 = vmatpush1.bf16.msra.mxu0 0
      %1638 = vmatprep.subr.bf16.mxu0 0
      %1639 = vmatpush1.bf16.msra.mxu0 0
      %1640 = vmatprep.subr.bf16.mxu0 0
      %1641 = vmatpush1.bf16.msra.mxu0 0
      %1642 = vmatprep.mubr.bf16.mxu0 0
      %1643 = vmatmul.mubr.bf16.gmra.mrb[0].mxu0 %v1531
      %v1644 = vpop.f32.mrb[0].mxu0
      %v1645 = vadd.f32 %v1560, %v1644
      %v1646 = vpop.f32.mrb[0].mxu0
      %v1647 = vpop.f32.mrb[0].mxu0
      %v1648 = vadd.f32 %v1560, %v1647
      %v1649 = vpop.f32.mrb[0].mxu0
      %1650 = vmatprep.mubr.bf16.mxu0 0
      %1651 = vmatmul.mubr.bf16.gmra.mrb[0].mxu0 %v1532
      %v1652 = vpop.f32.mrb[0].mxu0
      %v1653 = vadd.f32 %v1560, %v1652
      %v1654 = vpop.f32.mrb[0].mxu0
      %v1655 = vpop.f32.mrb[0].mxu0
      %v1656 = vadd.f32 %v1560, %v1655
      %v1657 = vpop.f32.mrb[0].mxu0
      %1658 = vmatprep.mubr.bf16.mxu0 0
      %1659 = vmatmul.mubr.bf16.gmra.mrb[0].mxu0 %v1533
      %v1660 = vpop.f32.mrb[0].mxu0
      %v1661 = vadd.f32 %v1560, %v1660
      %v1662 = vpop.f32.mrb[0].mxu0
      %v1663 = vpop.f32.mrb[0].mxu0
      %v1664 = vadd.f32 %v1560, %v1663
      %v1665 = vpop.f32.mrb[0].mxu0
      %1666 = vmatprep.mubr.bf16.mxu0 0
      %1667 = vmatmul.mubr.bf16.gmra.mrb[0].mxu0 %v1534
      %v1668 = vpop.f32.mrb[0].mxu0
      %v1669 = vadd.f32 %v1560, %v1668
      %v1670 = vpop.f32.mrb[0].mxu0
      %v1671 = vpop.f32.mrb[0].mxu0
      %v1672 = vadd.f32 %v1560, %v1671
      %v1673 = vpop.f32.mrb[0].mxu0
      %1674 = vmatprep.mubr.bf16.mxu0 0
      %1675 = vmatmul.mubr.bf16.gmra.mrb[0].mxu0 %v1535
      %v1676 = vpop.f32.mrb[0].mxu0
      %v1677 = vadd.f32 %v1560, %v1676
      %v1678 = vpop.f32.mrb[0].mxu0
      %v1679 = vpop.f32.mrb[0].mxu0
      %v1680 = vadd.f32 %v1560, %v1679
      %v1681 = vpop.f32.mrb[0].mxu0
      %1682 = vmatprep.mubr.bf16.mxu0 0
      %1683 = vmatmul.mubr.bf16.gmra.mrb[0].mxu0 %v1536
      %v1684 = vpop.f32.mrb[0].mxu0
      %v1685 = vadd.f32 %v1560, %v1684
      %v1686 = vpop.f32.mrb[0].mxu0
      %v1687 = vpop.f32.mrb[0].mxu0
      %v1688 = vadd.f32 %v1560, %v1687
      %v1689 = vpop.f32.mrb[0].mxu0
      %1690 = vmatprep.mubr.bf16.mxu0 0
      %1691 = vmatmul.mubr.bf16.gmra.mrb[0].mxu0 %v1537
      %v1692 = vpop.f32.mrb[0].mxu0
      %v1693 = vadd.f32 %v1560, %v1692
      %v1694 = vpop.f32.mrb[0].mxu0
      %v1695 = vpop.f32.mrb[0].mxu0
      %v1696 = vadd.f32 %v1560, %v1695
      %v1697 = vpop.f32.mrb[0].mxu0
      %1698 = vmatprep.mubr.bf16.mxu0 0
      %1699 = vmatmul.mubr.bf16.gmra.mrb[0].mxu0 %v1538
      %v1700 = vpop.f32.mrb[0].mxu0
      %v1701 = vadd.f32 %v1560, %v1700
      %v1702 = vpop.f32.mrb[0].mxu0
      %v1703 = vpop.f32.mrb[0].mxu0
      %v1704 = vadd.f32 %v1560, %v1703
      %v1705 = vpop.f32.mrb[0].mxu0
      %1706 = vdwg.mxu0
      %vm1707 = vcmask 15360
      %1708 = vst.msk [vmem:[%s437] sm:$0xff] %vm1707, %v1645
      %1709 = vst.msk [vmem:[%s437 + $0x8] sm:$0xff] %vm1707, %v1648
      %1710 = vst.msk [vmem:[%s437 + $0x10] sm:$0xff] %vm1707, %v1653
      %1711 = vst.msk [vmem:[%s437 + $0x18] sm:$0xff] %vm1707, %v1656
      %1712 = vst.msk [vmem:[%s437 + $0x20] sm:$0xff] %vm1707, %v1661
      %1713 = vst.msk [vmem:[%s437 + $0x28] sm:$0xff] %vm1707, %v1664
      %1714 = vst.msk [vmem:[%s437 + $0x30] sm:$0xff] %vm1707, %v1669
      %1715 = vst.msk [vmem:[%s437 + $0x38] sm:$0xff] %vm1707, %v1672
      %1716 = vst.msk [vmem:[%s437 + $0x40] sm:$0xff] %vm1707, %v1677
      %1717 = vst.msk [vmem:[%s437 + $0x48] sm:$0xff] %vm1707, %v1680
      %1718 = vst.msk [vmem:[%s437 + $0x50] sm:$0xff] %vm1707, %v1685
      %1719 = vst.msk [vmem:[%s437 + $0x58] sm:$0xff] %vm1707, %v1688
      %1720 = vst.msk [vmem:[%s437 + $0x60] sm:$0xff] %vm1707, %v1693
      %1721 = vst.msk [vmem:[%s437 + $0x68] sm:$0xff] %vm1707, %v1696
      %1722 = vst.msk [vmem:[%s437 + $0x70] sm:$0xff] %vm1707, %v1701
      %1723 = vst.msk [vmem:[%s437 + $0x78] sm:$0xff] %vm1707, %v1704
      %s1724 = smul.u32 16, %s23
      %p1725 = scmp.lt.s32.totalorder %s1724, 31
      %s1726 = scalar_select %p1725, %s1724, 31
      %s1727 = smul.addr %s1726, 8
      %s1728 = scalar_lea.vmem %s12, %s1727
      // Predicated region
      $region69: #{mlp_forward.1} parent=67 // pred_check
        %p1729 = pneg %p303
      $region70: #{mlp_forward.1} parent=67 // pred_check_branch
        %1731 = sbr.rel (%p1729) target = $region72
      $region71: #{mlp_forward.1} parent=67 // pred_region
        %s1732 = smul.u32 16, %s23
      $region72: #{mlp_forward.1} parent=67 // pred_fallthru
        _
    $region68: #{mlp_forward.1} parent=5 // pred_fallthru
      _
    %p1733 = scmp.le.s32.totalorder 2, %s18
    // Predicated region
    $region73: #{mlp_forward.1} parent=5 // pred_check
      %p1734 = pneg %p1733
    $region74: #{mlp_forward.1} parent=5 // pred_check_branch
      %1736 = sbr.rel (%p1734) target = $region76
    $region75: #{mlp_forward.1} parent=5 // pred_region
      %s1737 = ssub.s32 %s18, 2
      // Predicated region
      $region77: #{mlp_forward.1} parent=75 // pred_check
        %p1738 = pneg %p309
      $region78: #{mlp_forward.1} parent=75 // pred_check_branch
        %1740 = sbr.rel (%p1738) target = $region80
      $region79: #{mlp_forward.1} parent=75 // pred_region
        %s1741 = smul.u32 16, %s24
        %p1742 = scmp.lt.s32.totalorder %s1741, 31
        %s1743 = scalar_select %p1742, %s1741, 31
        %s1744 = smul.addr %s1743, 8
        %s1745 = scalar_lea.vmem %s12, %s1744
      $region80: #{mlp_forward.1} parent=75 // pred_fallthru
        _
    $region76: #{mlp_forward.1} parent=5 // pred_fallthru
      _
  $region6: #{mlp_forward.1} parent=0 // loop_footer
    %s22 = sadd.s32 1, %s18
  $region7: #{mlp_forward.1} parent=0 // loop_footer_branch
    %17 = sbr.rel target = $region3
  $region8: #{mlp_forward.1} parent=0 // loop_exit
    _

</llo_original>
